<compile_context>
chip_gen: v7x
topology: tpu7x:2x2x1
jax: 0.10.0
libtpu: 0.0.40
codegen_flags: <defaults>
</compile_context>

<pallas_src>
import functools

import jax
import jax.numpy as jnp
from jax.experimental import pallas as pl
from jax.experimental.pallas import tpu as pltpu


_LN_EPS = 1e-5          # PyTorch nn.LayerNorm default
_MASK_VALUE = -1e30     # large finite negative (identical softmax result to -inf for
                        # non-degenerate rows, avoids NaN if a row were fully masked)


def _encoder_layer_kernel(
    x_ref, npad_ref, keymask_ref,
    wqkv_ref, bqkv_ref, wfc_ref, bfc_ref,
    ln1_g_ref, ln1_b_ref,
    w1_ref, b1_ref, w2_ref, b2_ref,
    ln2_g_ref, ln2_b_ref,
    out_ref, attn_ref=None,
    *, n_head, d_k, d_v,
):
    f32 = jnp.float32
    cdt = x_ref.dtype                       # compute dtype for MXU operands (bf16 or f32)
    approx = cdt != jnp.float32             # approx EUP reciprocal only on the fast path
    bt, L, d_model = x_ref.shape
    m_rows = bt * L

    x = x_ref[...]                          # (bt, L, d_model)
    x2 = x.reshape(m_rows, d_model)         # flatten batch*seq for the dense matmuls

    # ---- fused Q/K/V projection: one wide MXU matmul, f32 accumulation ------
    qkv = jnp.dot(x2, wqkv_ref[...], preferred_element_type=f32) + bqkv_ref[...]
    q_all = qkv[:, : n_head * d_k]
    k_all = qkv[:, n_head * d_k: 2 * n_head * d_k]
    v_all = qkv[:, 2 * n_head * d_k:]

    # key-padding bias, hoisted out of the head loop: (bt, 1, L), 0 for valid keys
    neg_bias = jnp.where(keymask_ref[...] > 0.0, 0.0, _MASK_VALUE).astype(f32)
    inv_temp = f32(1.0 / (float(d_k) ** 0.5))

    fc_acc = jnp.zeros((m_rows, d_model), f32)   # folded output projection accumulator

    for h in range(n_head):                  # static unroll; n_head is small
        q_h = q_all[:, h * d_k:(h + 1) * d_k].astype(cdt).reshape(bt, L, d_k)
        k_h = k_all[:, h * d_k:(h + 1) * d_k].astype(cdt).reshape(bt, L, d_k)
        v_h = v_all[:, h * d_v:(h + 1) * d_v].astype(cdt).reshape(bt, L, d_v)

        # scores: contraction over d_k, no materialized transpose of k
        s = jnp.einsum("bqd,bkd->bqk", q_h, k_h,
                       preferred_element_type=f32) * inv_temp + neg_bias
        m = jnp.max(s, axis=-1, keepdims=True)
        e = jnp.exp(s - m)
        denom = jnp.sum(e, axis=-1, keepdims=True)
        p = e * pl.reciprocal(denom, approx=approx)          # softmax probs, f32
        if attn_ref is not None:
            attn_ref[h] = p                                  # already in final layout

        o_h = jnp.einsum("bqk,bkd->bqd", p.astype(cdt), v_h,
                         preferred_element_type=f32)         # (bt, L, d_v)
        # fold the output projection per head: no lane-axis concat
        fc_acc = fc_acc + jnp.dot(o_h.reshape(m_rows, d_v).astype(cdt),
                                  wfc_ref[h], preferred_element_type=f32)

    fc = fc_acc + bfc_ref[...]

    # ---- residual + LayerNorm 1 (f32) ----------------------------------------
    y = fc + x2.astype(f32)
    mu = jnp.mean(y, axis=-1, keepdims=True)
    var = jnp.mean(jnp.square(y - mu), axis=-1, keepdims=True)
    y = (y - mu) * jax.lax.rsqrt(var + _LN_EPS) * ln1_g_ref[...] + ln1_b_ref[...]

    npad = npad_ref[...].reshape(m_rows, 1)
    y = y * npad                              # enc_output *= non_pad_mask

    # ---- position-wise FFN (Conv1d kernel=1 == per-position Linear) -----------
    h1 = jnp.dot(y.astype(cdt), w1_ref[...], preferred_element_type=f32) + b1_ref[...]
    h1 = jnp.maximum(h1, 0.0)
    h2 = jnp.dot(h1.astype(cdt), w2_ref[...], preferred_element_type=f32) + b2_ref[...]
    z = h2 + y                                # residual
    mu2 = jnp.mean(z, axis=-1, keepdims=True)
    var2 = jnp.mean(jnp.square(z - mu2), axis=-1, keepdims=True)
    z = (z - mu2) * jax.lax.rsqrt(var2 + _LN_EPS) * ln2_g_ref[...] + ln2_b_ref[...]

    # enc_output *= non_pad_mask (again)
    out_ref[...] = (z * npad).reshape(bt, L, d_model).astype(out_ref.dtype)


def encoder_layer(enc_input, non_pad_mask, params, *, n_head, d_k, d_v,
                  return_attn=True, compute_dtype=jnp.bfloat16, block_b=None):
    """Fused EncoderLayer forward.  slf_attn_mask is rebuilt in-kernel from non_pad_mask
    (canonical key-padding usage of the module)."""
    B, L, d_model = enc_input.shape
    d_inner = params["w1"].shape[1]
    f32 = jnp.float32

    if block_b is None:
        # >=2 grid steps when possible (keeps both v7x TensorCores busy) while still
        # batching rows to fill the MXU M dimension.
        block_b = max(1, min(8, B // 2)) if B > 1 else 1
    bt = block_b
    n_blk = pl.cdiv(B, bt)

    # fused QKV weight/bias; output projection stored head-major so per-head slices are
    # leading-dim (sublane) slices, not lane slices.
    wqkv = jnp.concatenate([params["wq"], params["wk"], params["wv"]], axis=1)
    bqkv = jnp.concatenate([params["bq"], params["bk"], params["bv"]], axis=1).astype(f32)
    wfc3 = params["wfc"].reshape(n_head, d_v, d_model)

    cdt = compute_dtype
    x = enc_input.astype(cdt)
    npad = non_pad_mask.astype(f32)                                  # (B, L, 1)
    keymask = jnp.transpose(non_pad_mask, (0, 2, 1)).astype(f32)     # (B, 1, L)

    weights = [
        wqkv.astype(cdt), bqkv,
        wfc3.astype(cdt), params["bfc"].astype(f32),
        params["ln1_g"].astype(f32), params["ln1_b"].astype(f32),
        params["w1"].astype(cdt), params["b1"].astype(f32),
        params["w2"].astype(cdt), params["b2"].astype(f32),
        params["ln2_g"].astype(f32), params["ln2_b"].astype(f32),
    ]
    full = lambda a: pl.BlockSpec(a.shape, lambda b: (0,) * a.ndim)

    in_specs = [
        pl.BlockSpec((bt, L, d_model), lambda b: (b, 0, 0)),
        pl.BlockSpec((bt, L, 1), lambda b: (b, 0, 0)),
        pl.BlockSpec((bt, 1, L), lambda b: (b, 0, 0)),
    ] + [full(a) for a in weights]

    out_shapes = [jax.ShapeDtypeStruct((B, L, d_model), f32)]
    out_specs = [pl.BlockSpec((bt, L, d_model), lambda b: (b, 0, 0))]
    if return_attn:
        # written directly in PyTorch (head-major) layout: (n_head, B, L, L)
        out_shapes.append(jax.ShapeDtypeStruct((n_head, B, L, L), f32))
        out_specs.append(pl.BlockSpec((n_head, bt, L, L), lambda b: (0, b, 0, 0)))

    # explicit VMEM budget with headroom (rough estimate; clamped to be safe on all chips)
    csz = jnp.dtype(cdt).itemsize
    est = 2 * (bt * L * d_model * (csz + 4)
               + bt * L * 8
               + (n_head * bt * L * L * 4 if return_attn else 0))
    est += 2 * sum(int(a.size) * a.dtype.itemsize for a in weights)
    est += 4 * (bt * L * (n_head * (2 * d_k + d_v) + d_inner + 4 * d_model)
                + 2 * bt * L * L)
    vmem_limit = int(min(max(2 * est, 32 * 1024 * 1024), 64 * 1024 * 1024))

    kernel = functools.partial(_encoder_layer_kernel,
                               n_head=n_head, d_k=d_k, d_v=d_v)
    outs = pl.pallas_call(
        kernel,
        out_shape=tuple(out_shapes),
        grid_spec=pltpu.PrefetchScalarGridSpec(
            num_scalar_prefetch=0,
            grid=(n_blk,),
            in_specs=in_specs,
            out_specs=tuple(out_specs),
        ),
        compiler_params=pltpu.CompilerParams(
            dimension_semantics=("parallel",),
            vmem_limit_bytes=vmem_limit),
    )(x, npad, keymask, *weights)

    if return_attn:
        out, attn = outs
        # (n_head, B, L, L) -> (n_head*B, L, L): contiguous, free (PyTorch ordering)
        return out, attn.reshape(n_head * B, L, L)
    out = outs[0] if isinstance(outs, (tuple, list)) else outs
    return out, None


def _reference(enc_input, non_pad_mask, slf_attn_mask, params, *, n_head, d_k, d_v):
    """Pure-JAX f32 reference replicating the PyTorch forward (eval mode)."""
    x = enc_input
    B, L, D = x.shape
    q = x @ params["wq"] + params["bq"][0]
    k = x @ params["wk"] + params["bk"][0]
    v = x @ params["wv"] + params["bv"][0]
    q = q.reshape(B, L, n_head, d_k).transpose(0, 2, 1, 3)
    k = k.reshape(B, L, n_head, d_k).transpose(0, 2, 1, 3)
    v = v.reshape(B, L, n_head, d_v).transpose(0, 2, 1, 3)
    s = jnp.einsum("bhqd,bhkd->bhqk", q, k) / jnp.sqrt(jnp.float32(d_k))
    s = jnp.where(slf_attn_mask[:, None, :, :] > 0, -jnp.inf, s)
    p = jax.nn.softmax(s, axis=-1)
    o = jnp.einsum("bhqk,bhkd->bhqd", p, v).transpose(0, 2, 1, 3).reshape(B, L, n_head * d_v)
    o = o @ params["wfc"] + params["bfc"][0]
    y = o + x
    mu = y.mean(-1, keepdims=True)
    var = ((y - mu) ** 2).mean(-1, keepdims=True)
    y = (y - mu) / jnp.sqrt(var + 1e-5) * params["ln1_g"][0] + params["ln1_b"][0]
    y = y * non_pad_mask
    h = jnp.maximum(y @ params["w1"] + params["b1"][0], 0.0)
    z = h @ params["w2"] + params["b2"][0] + y
    mu2 = z.mean(-1, keepdims=True)
    var2 = ((z - mu2) ** 2).mean(-1, keepdims=True)
    z = (z - mu2) / jnp.sqrt(var2 + 1e-5) * params["ln2_g"][0] + params["ln2_b"][0]
    z = z * non_pad_mask
    attn = jnp.transpose(p, (1, 0, 2, 3)).reshape(n_head * B, L, L)
    return z, attn


if __name__ == "__main__":
    # Small deterministic problem
    B, L = 2, 8
    d_model, d_inner = 32, 64
    n_head, d_k, d_v = 4, 8, 8

    key = jax.random.PRNGKey(0)
    ks = jax.random.split(key, 16)
    scale = 0.1
    params = {
        "wq": scale * jax.random.normal(ks[0], (d_model, n_head * d_k), jnp.float32),
        "bq": scale * jax.random.normal(ks[1], (1, n_head * d_k), jnp.float32),
        "wk": scale * jax.random.normal(ks[2], (d_model, n_head * d_k), jnp.float32),
        "bk": scale * jax.random.normal(ks[3], (1, n_head * d_k), jnp.float32),
        "wv": scale * jax.random.normal(ks[4], (d_model, n_head * d_v), jnp.float32),
        "bv": scale * jax.random.normal(ks[5], (1, n_head * d_v), jnp.float32),
        "wfc": scale * jax.random.normal(ks[6], (n_head * d_v, d_model), jnp.float32),
        "bfc": scale * jax.random.normal(ks[7], (1, d_model), jnp.float32),
        "ln1_g": jnp.ones((1, d_model), jnp.float32),
        "ln1_b": jnp.zeros((1, d_model), jnp.float32),
        "w1": scale * jax.random.normal(ks[8], (d_model, d_inner), jnp.float32),
        "b1": scale * jax.random.normal(ks[9], (1, d_inner), jnp.float32),
        "w2": scale * jax.random.normal(ks[10], (d_inner, d_model), jnp.float32),
        "b2": scale * jax.random.normal(ks[11], (1, d_model), jnp.float32),
        "ln2_g": jnp.ones((1, d_model), jnp.float32),
        "ln2_b": jnp.zeros((1, d_model), jnp.float32),
    }

    enc_input = jax.random.normal(ks[12], (B, L, d_model), jnp.float32)

    # Batch 1 has two padded positions at the end (no fully-masked attention rows).
    non_pad_mask = jnp.ones((B, L, 1), jnp.float32).at[1, 6:, 0].set(0.0)
    # Canonical key-padding attention mask (only used by the pure-JAX reference).
    slf_attn_mask = jnp.broadcast_to((1.0 - non_pad_mask[:, :, 0])[:, None, :], (B, L, L))

    ref_out, ref_attn = _reference(enc_input, non_pad_mask, slf_attn_mask, params,
                                   n_head=n_head, d_k=d_k, d_v=d_v)

    # ---- float32 compute path: tight numerical check --------------------------
    out32, attn32 = encoder_layer(enc_input, non_pad_mask, params,
                                  n_head=n_head, d_k=d_k, d_v=d_v,
                                  compute_dtype=jnp.float32, return_attn=True)
    out32 = jax.block_until_ready(out32)
    attn32 = jax.block_until_ready(attn32)
    assert out32.shape == (B, L, d_model)
    assert attn32.shape == (n_head * B, L, L)
    assert jnp.allclose(out32, ref_out, atol=2e-4, rtol=2e-4)
    assert jnp.allclose(attn32, ref_attn, atol=2e-4, rtol=2e-4)

    # ---- bfloat16 fast path (MXU-native): looser tolerance ---------------------
    out16, attn16 = encoder_layer(enc_input, non_pad_mask, params,
                                  n_head=n_head, d_k=d_k, d_v=d_v,
                                  compute_dtype=jnp.bfloat16, return_attn=True)
    out16 = jax.block_until_ready(out16)
    attn16 = jax.block_until_ready(attn16)
    assert jnp.allclose(out16, ref_out, atol=5e-2, rtol=5e-2)
    assert jnp.allclose(attn16, ref_attn, atol=5e-2, rtol=5e-2)

    # ---- attention output skipped (biggest HBM write avoided) ------------------
    out_na, attn_na = encoder_layer(enc_input, non_pad_mask, params,
                                    n_head=n_head, d_k=d_k, d_v=d_v,
                                    compute_dtype=jnp.bfloat16, return_attn=False)
    out_na = jax.block_until_ready(out_na)
    assert attn_na is None
    assert jnp.allclose(out_na, ref_out, atol=5e-2, rtol=5e-2)

    print("KERNEL_OK")
</pallas_src>

<mosaic_0001>
module attributes {stable_mosaic.version = 11 : i64} {
  func.func @_encoder_layer_kernel(%arg0: i32, %arg1: memref<1x8x32xf32, #tpu.memory_space<vmem>>, %arg2: memref<1x8x1xf32, #tpu.memory_space<vmem>>, %arg3: memref<1x1x8xf32, #tpu.memory_space<vmem>>, %arg4: memref<32x96xf32, #tpu.memory_space<vmem>>, %arg5: memref<1x96xf32, #tpu.memory_space<vmem>>, %arg6: memref<4x8x32xf32, #tpu.memory_space<vmem>>, %arg7: memref<1x32xf32, #tpu.memory_space<vmem>>, %arg8: memref<1x32xf32, #tpu.memory_space<vmem>>, %arg9: memref<1x32xf32, #tpu.memory_space<vmem>>, %arg10: memref<32x64xf32, #tpu.memory_space<vmem>>, %arg11: memref<1x64xf32, #tpu.memory_space<vmem>>, %arg12: memref<64x32xf32, #tpu.memory_space<vmem>>, %arg13: memref<1x32xf32, #tpu.memory_space<vmem>>, %arg14: memref<1x32xf32, #tpu.memory_space<vmem>>, %arg15: memref<1x32xf32, #tpu.memory_space<vmem>>, %arg16: memref<1x8x32xf32, #tpu.memory_space<vmem>>, %arg17: memref<4x1x8x8xf32, #tpu.memory_space<vmem>>) attributes {dimension_semantics = [#tpu.dimension_semantics<parallel>], iteration_bounds = array<i64: 2>, scalar_prefetch = 0 : i64, scratch_operands = 0 : i64, tpu.core_type = #tpu.core_type<tc>, window_params = [{transform_indices = @transform_0, window_bounds = array<i64: 1, 8, 32>}, {transform_indices = @transform_1, window_bounds = array<i64: 1, 8, 1>}, {transform_indices = @transform_2, window_bounds = array<i64: 1, 1, 8>}, {pipeline_mode = #tpu.pipeline_mode<synchronous>, transform_indices = @transform_3, window_bounds = array<i64: 32, 96>}, {pipeline_mode = #tpu.pipeline_mode<synchronous>, transform_indices = @transform_4, window_bounds = array<i64: 1, 96>}, {pipeline_mode = #tpu.pipeline_mode<synchronous>, transform_indices = @transform_5, window_bounds = array<i64: 4, 8, 32>}, {pipeline_mode = #tpu.pipeline_mode<synchronous>, transform_indices = @transform_6, window_bounds = array<i64: 1, 32>}, {pipeline_mode = #tpu.pipeline_mode<synchronous>, transform_indices = @transform_7, window_bounds = array<i64: 1, 32>}, {pipeline_mode = #tpu.pipeline_mode<synchronous>, transform_indices = @transform_8, window_bounds = array<i64: 1, 32>}, {pipeline_mode = #tpu.pipeline_mode<synchronous>, transform_indices = @transform_9, window_bounds = array<i64: 32, 64>}, {pipeline_mode = #tpu.pipeline_mode<synchronous>, transform_indices = @transform_10, window_bounds = array<i64: 1, 64>}, {pipeline_mode = #tpu.pipeline_mode<synchronous>, transform_indices = @transform_11, window_bounds = array<i64: 64, 32>}, {pipeline_mode = #tpu.pipeline_mode<synchronous>, transform_indices = @transform_12, window_bounds = array<i64: 1, 32>}, {pipeline_mode = #tpu.pipeline_mode<synchronous>, transform_indices = @transform_13, window_bounds = array<i64: 1, 32>}, {pipeline_mode = #tpu.pipeline_mode<synchronous>, transform_indices = @transform_14, window_bounds = array<i64: 1, 32>}, {transform_indices = @transform_15, window_bounds = array<i64: 1, 8, 32>}, {transform_indices = @transform_16, window_bounds = array<i64: 4, 1, 8, 8>}]} {
    %c0 = arith.constant 0 : index
    %c0_0 = arith.constant 0 : index
    %c0_1 = arith.constant 0 : index
    %0 = vector.load %arg1[%c0, %c0_0, %c0_1] : memref<1x8x32xf32, #tpu.memory_space<vmem>>, vector<1x8x32xf32>
    %1 = vector.shape_cast %0 : vector<1x8x32xf32> to vector<8x32xf32>
    %c0_2 = arith.constant 0 : index
    %c0_3 = arith.constant 0 : index
    %2 = vector.load %arg4[%c0_2, %c0_3] : memref<32x96xf32, #tpu.memory_space<vmem>>, vector<32x96xf32>
    %cst = arith.constant dense<0.000000e+00> : vector<8x96xf32>
    %3 = tpu.matmul %1, %2, %cst {dimension_numbers = #tpu.dot_dimension_numbers<[1], [0], [0], [1], [0, 0, 1, 1], [], []>} : vector<8x32xf32>, vector<32x96xf32>, vector<8x96xf32> -> vector<8x96xf32>
    %c0_4 = arith.constant 0 : index
    %c0_5 = arith.constant 0 : index
    %4 = vector.load %arg5[%c0_4, %c0_5] : memref<1x96xf32, #tpu.memory_space<vmem>>, vector<1x96xf32>
    %5 = vector.broadcast %4 : vector<1x96xf32> to vector<8x96xf32>
    %6 = arith.addf %3, %5 : vector<8x96xf32>
    %7 = vector.extract_strided_slice %6 {offsets = [0, 0], sizes = [8, 32], strides = [1, 1]} : vector<8x96xf32> to vector<8x32xf32>
    %8 = vector.extract_strided_slice %6 {offsets = [0, 32], sizes = [8, 32], strides = [1, 1]} : vector<8x96xf32> to vector<8x32xf32>
    %9 = vector.extract_strided_slice %6 {offsets = [0, 64], sizes = [8, 32], strides = [1, 1]} : vector<8x96xf32> to vector<8x32xf32>
    %c0_6 = arith.constant 0 : index
    %c0_7 = arith.constant 0 : index
    %c0_8 = arith.constant 0 : index
    %10 = vector.load %arg3[%c0_6, %c0_7, %c0_8] : memref<1x1x8xf32, #tpu.memory_space<vmem>>, vector<1x1x8xf32>
    %cst_9 = arith.constant 0.000000e+00 : f32
    %11 = vector.broadcast %cst_9 : f32 to vector<1x1x8xf32>
    %12 = arith.cmpf ogt, %10, %11 : vector<1x1x8xf32>
    %cst_10 = arith.constant 0.000000e+00 : f32
    %cst_11 = arith.constant -1.000000e+30 : f32
    %13 = vector.broadcast %cst_10 : f32 to vector<1x1x8xf32>
    %14 = vector.broadcast %cst_11 : f32 to vector<1x1x8xf32>
    %15 = arith.select %12, %13, %14 : vector<1x1x8xi1>, vector<1x1x8xf32>
    %cst_12 = arith.constant 0.000000e+00 : f32
    %16 = vector.broadcast %cst_12 : f32 to vector<8x32xf32>
    %17 = vector.extract_strided_slice %7 {offsets = [0, 0], sizes = [8, 8], strides = [1, 1]} : vector<8x32xf32> to vector<8x8xf32>
    %18 = vector.shape_cast %17 : vector<8x8xf32> to vector<1x8x8xf32>
    %19 = vector.extract_strided_slice %8 {offsets = [0, 0], sizes = [8, 8], strides = [1, 1]} : vector<8x32xf32> to vector<8x8xf32>
    %20 = vector.shape_cast %19 : vector<8x8xf32> to vector<1x8x8xf32>
    %21 = vector.extract_strided_slice %9 {offsets = [0, 0], sizes = [8, 8], strides = [1, 1]} : vector<8x32xf32> to vector<8x8xf32>
    %22 = vector.shape_cast %21 : vector<8x8xf32> to vector<1x8x8xf32>
    "tpu.trace_start"() <{level = 10 : i32, message = "bqd,bkd->bqk"}> : () -> ()
    %cst_13 = arith.constant dense<0.000000e+00> : vector<1x8x8xf32>
    %23 = tpu.matmul %18, %20, %cst_13 {dimension_numbers = #tpu.dot_dimension_numbers<[2], [2], [1], [1], [0, 0, 0, 1, 1, 1], [0], [0]>} : vector<1x8x8xf32>, vector<1x8x8xf32>, vector<1x8x8xf32> -> vector<1x8x8xf32>
    "tpu.trace_stop"() : () -> ()
    %cst_14 = arith.constant 0.353553385 : f32
    %24 = vector.broadcast %cst_14 : f32 to vector<1x8x8xf32>
    %25 = arith.mulf %23, %24 : vector<1x8x8xf32>
    %26 = vector.broadcast %15 : vector<1x1x8xf32> to vector<1x8x8xf32>
    %27 = arith.addf %25, %26 : vector<1x8x8xf32>
    %cst_15 = arith.constant dense<0xFF800000> : vector<1x8xf32>
    %28 = vector.multi_reduction <maximumf>, %27, %cst_15 [2] : vector<1x8x8xf32> to vector<1x8xf32>
    %29 = vector.shape_cast %28 : vector<1x8xf32> to vector<1x8x1xf32>
    %30 = vector.broadcast %29 : vector<1x8x1xf32> to vector<1x8x8xf32>
    %31 = arith.subf %27, %30 : vector<1x8x8xf32>
    %32 = math.exp %31 : vector<1x8x8xf32>
    %cst_16 = arith.constant dense<0.000000e+00> : vector<1x8xf32>
    %33 = vector.multi_reduction <add>, %32, %cst_16 [2] : vector<1x8x8xf32> to vector<1x8xf32>
    %34 = vector.shape_cast %33 : vector<1x8xf32> to vector<1x8x1xf32>
    %35 = tpu.reciprocal %34 : vector<1x8x1xf32> -> vector<1x8x1xf32>
    %36 = vector.broadcast %35 : vector<1x8x1xf32> to vector<1x8x8xf32>
    %37 = arith.mulf %32, %36 : vector<1x8x8xf32>
    %c0_17 = arith.constant 0 : index
    %c0_18 = arith.constant 0 : index
    %c0_19 = arith.constant 0 : index
    %c0_20 = arith.constant 0 : index
    %38 = vector.load %arg17[%c0_17, %c0_18, %c0_19, %c0_20] : memref<4x1x8x8xf32, #tpu.memory_space<vmem>>, vector<1x1x8x8xf32>
    %39 = vector.shape_cast %38 : vector<1x1x8x8xf32> to vector<1x8x8xf32>
    %40 = vector.shape_cast %37 : vector<1x8x8xf32> to vector<1x1x8x8xf32>
    tpu.vector_store %arg17[%c0_17, %c0_18, %c0_19, %c0_20], %40 {strides = array<i32>} : memref<4x1x8x8xf32, #tpu.memory_space<vmem>>, vector<1x1x8x8xf32>,
    "tpu.trace_start"() <{level = 10 : i32, message = "bqk,bkd->bqd"}> : () -> ()
    %cst_21 = arith.constant dense<0.000000e+00> : vector<1x8x8xf32>
    %41 = tpu.matmul %37, %22, %cst_21 {dimension_numbers = #tpu.dot_dimension_numbers<[2], [1], [1], [2], [0, 0, 0, 1, 1, 2], [0], [0]>} : vector<1x8x8xf32>, vector<1x8x8xf32>, vector<1x8x8xf32> -> vector<1x8x8xf32>
    "tpu.trace_stop"() : () -> ()
    %42 = vector.shape_cast %41 : vector<1x8x8xf32> to vector<8x8xf32>
    %c0_22 = arith.constant 0 : index
    %c0_23 = arith.constant 0 : index
    %c0_24 = arith.constant 0 : index
    %43 = vector.load %arg6[%c0_22, %c0_23, %c0_24] : memref<4x8x32xf32, #tpu.memory_space<vmem>>, vector<1x8x32xf32>
    %44 = vector.shape_cast %43 : vector<1x8x32xf32> to vector<8x32xf32>
    %cst_25 = arith.constant dense<0.000000e+00> : vector<8x32xf32>
    %45 = tpu.matmul %42, %44, %cst_25 {dimension_numbers = #tpu.dot_dimension_numbers<[1], [0], [0], [1], [0, 0, 1, 1], [], []>} : vector<8x8xf32>, vector<8x32xf32>, vector<8x32xf32> -> vector<8x32xf32>
    %46 = arith.addf %16, %45 : vector<8x32xf32>
    %47 = vector.extract_strided_slice %7 {offsets = [0, 8], sizes = [8, 8], strides = [1, 1]} : vector<8x32xf32> to vector<8x8xf32>
    %48 = vector.shape_cast %47 : vector<8x8xf32> to vector<1x8x8xf32>
    %49 = vector.extract_strided_slice %8 {offsets = [0, 8], sizes = [8, 8], strides = [1, 1]} : vector<8x32xf32> to vector<8x8xf32>
    %50 = vector.shape_cast %49 : vector<8x8xf32> to vector<1x8x8xf32>
    %51 = vector.extract_strided_slice %9 {offsets = [0, 8], sizes = [8, 8], strides = [1, 1]} : vector<8x32xf32> to vector<8x8xf32>
    %52 = vector.shape_cast %51 : vector<8x8xf32> to vector<1x8x8xf32>
    "tpu.trace_start"() <{level = 10 : i32, message = "bqd,bkd->bqk"}> : () -> ()
    %cst_26 = arith.constant dense<0.000000e+00> : vector<1x8x8xf32>
    %53 = tpu.matmul %48, %50, %cst_26 {dimension_numbers = #tpu.dot_dimension_numbers<[2], [2], [1], [1], [0, 0, 0, 1, 1, 1], [0], [0]>} : vector<1x8x8xf32>, vector<1x8x8xf32>, vector<1x8x8xf32> -> vector<1x8x8xf32>
    "tpu.trace_stop"() : () -> ()
    %cst_27 = arith.constant 0.353553385 : f32
    %54 = vector.broadcast %cst_27 : f32 to vector<1x8x8xf32>
    %55 = arith.mulf %53, %54 : vector<1x8x8xf32>
    %56 = vector.broadcast %15 : vector<1x1x8xf32> to vector<1x8x8xf32>
    %57 = arith.addf %55, %56 : vector<1x8x8xf32>
    %cst_28 = arith.constant dense<0xFF800000> : vector<1x8xf32>
    %58 = vector.multi_reduction <maximumf>, %57, %cst_28 [2] : vector<1x8x8xf32> to vector<1x8xf32>
    %59 = vector.shape_cast %58 : vector<1x8xf32> to vector<1x8x1xf32>
    %60 = vector.broadcast %59 : vector<1x8x1xf32> to vector<1x8x8xf32>
    %61 = arith.subf %57, %60 : vector<1x8x8xf32>
    %62 = math.exp %61 : vector<1x8x8xf32>
    %cst_29 = arith.constant dense<0.000000e+00> : vector<1x8xf32>
    %63 = vector.multi_reduction <add>, %62, %cst_29 [2] : vector<1x8x8xf32> to vector<1x8xf32>
    %64 = vector.shape_cast %63 : vector<1x8xf32> to vector<1x8x1xf32>
    %65 = tpu.reciprocal %64 : vector<1x8x1xf32> -> vector<1x8x1xf32>
    %66 = vector.broadcast %65 : vector<1x8x1xf32> to vector<1x8x8xf32>
    %67 = arith.mulf %62, %66 : vector<1x8x8xf32>
    %c1 = arith.constant 1 : index
    %c0_30 = arith.constant 0 : index
    %c0_31 = arith.constant 0 : index
    %c0_32 = arith.constant 0 : index
    %68 = vector.load %arg17[%c1, %c0_30, %c0_31, %c0_32] : memref<4x1x8x8xf32, #tpu.memory_space<vmem>>, vector<1x1x8x8xf32>
    %69 = vector.shape_cast %68 : vector<1x1x8x8xf32> to vector<1x8x8xf32>
    %70 = vector.shape_cast %67 : vector<1x8x8xf32> to vector<1x1x8x8xf32>
    tpu.vector_store %arg17[%c1, %c0_30, %c0_31, %c0_32], %70 {strides = array<i32>} : memref<4x1x8x8xf32, #tpu.memory_space<vmem>>, vector<1x1x8x8xf32>,
    "tpu.trace_start"() <{level = 10 : i32, message = "bqk,bkd->bqd"}> : () -> ()
    %cst_33 = arith.constant dense<0.000000e+00> : vector<1x8x8xf32>
    %71 = tpu.matmul %67, %52, %cst_33 {dimension_numbers = #tpu.dot_dimension_numbers<[2], [1], [1], [2], [0, 0, 0, 1, 1, 2], [0], [0]>} : vector<1x8x8xf32>, vector<1x8x8xf32>, vector<1x8x8xf32> -> vector<1x8x8xf32>
    "tpu.trace_stop"() : () -> ()
    %72 = vector.shape_cast %71 : vector<1x8x8xf32> to vector<8x8xf32>
    %c1_34 = arith.constant 1 : index
    %c0_35 = arith.constant 0 : index
    %c0_36 = arith.constant 0 : index
    %73 = vector.load %arg6[%c1_34, %c0_35, %c0_36] : memref<4x8x32xf32, #tpu.memory_space<vmem>>, vector<1x8x32xf32>
    %74 = vector.shape_cast %73 : vector<1x8x32xf32> to vector<8x32xf32>
    %cst_37 = arith.constant dense<0.000000e+00> : vector<8x32xf32>
    %75 = tpu.matmul %72, %74, %cst_37 {dimension_numbers = #tpu.dot_dimension_numbers<[1], [0], [0], [1], [0, 0, 1, 1], [], []>} : vector<8x8xf32>, vector<8x32xf32>, vector<8x32xf32> -> vector<8x32xf32>
    %76 = arith.addf %46, %75 : vector<8x32xf32>
    %77 = vector.extract_strided_slice %7 {offsets = [0, 16], sizes = [8, 8], strides = [1, 1]} : vector<8x32xf32> to vector<8x8xf32>
    %78 = vector.shape_cast %77 : vector<8x8xf32> to vector<1x8x8xf32>
    %79 = vector.extract_strided_slice %8 {offsets = [0, 16], sizes = [8, 8], strides = [1, 1]} : vector<8x32xf32> to vector<8x8xf32>
    %80 = vector.shape_cast %79 : vector<8x8xf32> to vector<1x8x8xf32>
    %81 = vector.extract_strided_slice %9 {offsets = [0, 16], sizes = [8, 8], strides = [1, 1]} : vector<8x32xf32> to vector<8x8xf32>
    %82 = vector.shape_cast %81 : vector<8x8xf32> to vector<1x8x8xf32>
    "tpu.trace_start"() <{level = 10 : i32, message = "bqd,bkd->bqk"}> : () -> ()
    %cst_38 = arith.constant dense<0.000000e+00> : vector<1x8x8xf32>
    %83 = tpu.matmul %78, %80, %cst_38 {dimension_numbers = #tpu.dot_dimension_numbers<[2], [2], [1], [1], [0, 0, 0, 1, 1, 1], [0], [0]>} : vector<1x8x8xf32>, vector<1x8x8xf32>, vector<1x8x8xf32> -> vector<1x8x8xf32>
    "tpu.trace_stop"() : () -> ()
    %cst_39 = arith.constant 0.353553385 : f32
    %84 = vector.broadcast %cst_39 : f32 to vector<1x8x8xf32>
    %85 = arith.mulf %83, %84 : vector<1x8x8xf32>
    %86 = vector.broadcast %15 : vector<1x1x8xf32> to vector<1x8x8xf32>
    %87 = arith.addf %85, %86 : vector<1x8x8xf32>
    %cst_40 = arith.constant dense<0xFF800000> : vector<1x8xf32>
    %88 = vector.multi_reduction <maximumf>, %87, %cst_40 [2] : vector<1x8x8xf32> to vector<1x8xf32>
    %89 = vector.shape_cast %88 : vector<1x8xf32> to vector<1x8x1xf32>
    %90 = vector.broadcast %89 : vector<1x8x1xf32> to vector<1x8x8xf32>
    %91 = arith.subf %87, %90 : vector<1x8x8xf32>
    %92 = math.exp %91 : vector<1x8x8xf32>
    %cst_41 = arith.constant dense<0.000000e+00> : vector<1x8xf32>
    %93 = vector.multi_reduction <add>, %92, %cst_41 [2] : vector<1x8x8xf32> to vector<1x8xf32>
    %94 = vector.shape_cast %93 : vector<1x8xf32> to vector<1x8x1xf32>
    %95 = tpu.reciprocal %94 : vector<1x8x1xf32> -> vector<1x8x1xf32>
    %96 = vector.broadcast %95 : vector<1x8x1xf32> to vector<1x8x8xf32>
    %97 = arith.mulf %92, %96 : vector<1x8x8xf32>
    %c2 = arith.constant 2 : index
    %c0_42 = arith.constant 0 : index
    %c0_43 = arith.constant 0 : index
    %c0_44 = arith.constant 0 : index
    %98 = vector.load %arg17[%c2, %c0_42, %c0_43, %c0_44] : memref<4x1x8x8xf32, #tpu.memory_space<vmem>>, vector<1x1x8x8xf32>
    %99 = vector.shape_cast %98 : vector<1x1x8x8xf32> to vector<1x8x8xf32>
    %100 = vector.shape_cast %97 : vector<1x8x8xf32> to vector<1x1x8x8xf32>
    tpu.vector_store %arg17[%c2, %c0_42, %c0_43, %c0_44], %100 {strides = array<i32>} : memref<4x1x8x8xf32, #tpu.memory_space<vmem>>, vector<1x1x8x8xf32>,
    "tpu.trace_start"() <{level = 10 : i32, message = "bqk,bkd->bqd"}> : () -> ()
    %cst_45 = arith.constant dense<0.000000e+00> : vector<1x8x8xf32>
    %101 = tpu.matmul %97, %82, %cst_45 {dimension_numbers = #tpu.dot_dimension_numbers<[2], [1], [1], [2], [0, 0, 0, 1, 1, 2], [0], [0]>} : vector<1x8x8xf32>, vector<1x8x8xf32>, vector<1x8x8xf32> -> vector<1x8x8xf32>
    "tpu.trace_stop"() : () -> ()
    %102 = vector.shape_cast %101 : vector<1x8x8xf32> to vector<8x8xf32>
    %c2_46 = arith.constant 2 : index
    %c0_47 = arith.constant 0 : index
    %c0_48 = arith.constant 0 : index
    %103 = vector.load %arg6[%c2_46, %c0_47, %c0_48] : memref<4x8x32xf32, #tpu.memory_space<vmem>>, vector<1x8x32xf32>
    %104 = vector.shape_cast %103 : vector<1x8x32xf32> to vector<8x32xf32>
    %cst_49 = arith.constant dense<0.000000e+00> : vector<8x32xf32>
    %105 = tpu.matmul %102, %104, %cst_49 {dimension_numbers = #tpu.dot_dimension_numbers<[1], [0], [0], [1], [0, 0, 1, 1], [], []>} : vector<8x8xf32>, vector<8x32xf32>, vector<8x32xf32> -> vector<8x32xf32>
    %106 = arith.addf %76, %105 : vector<8x32xf32>
    %107 = vector.extract_strided_slice %7 {offsets = [0, 24], sizes = [8, 8], strides = [1, 1]} : vector<8x32xf32> to vector<8x8xf32>
    %108 = vector.shape_cast %107 : vector<8x8xf32> to vector<1x8x8xf32>
    %109 = vector.extract_strided_slice %8 {offsets = [0, 24], sizes = [8, 8], strides = [1, 1]} : vector<8x32xf32> to vector<8x8xf32>
    %110 = vector.shape_cast %109 : vector<8x8xf32> to vector<1x8x8xf32>
    %111 = vector.extract_strided_slice %9 {offsets = [0, 24], sizes = [8, 8], strides = [1, 1]} : vector<8x32xf32> to vector<8x8xf32>
    %112 = vector.shape_cast %111 : vector<8x8xf32> to vector<1x8x8xf32>
    "tpu.trace_start"() <{level = 10 : i32, message = "bqd,bkd->bqk"}> : () -> ()
    %cst_50 = arith.constant dense<0.000000e+00> : vector<1x8x8xf32>
    %113 = tpu.matmul %108, %110, %cst_50 {dimension_numbers = #tpu.dot_dimension_numbers<[2], [2], [1], [1], [0, 0, 0, 1, 1, 1], [0], [0]>} : vector<1x8x8xf32>, vector<1x8x8xf32>, vector<1x8x8xf32> -> vector<1x8x8xf32>
    "tpu.trace_stop"() : () -> ()
    %cst_51 = arith.constant 0.353553385 : f32
    %114 = vector.broadcast %cst_51 : f32 to vector<1x8x8xf32>
    %115 = arith.mulf %113, %114 : vector<1x8x8xf32>
    %116 = vector.broadcast %15 : vector<1x1x8xf32> to vector<1x8x8xf32>
    %117 = arith.addf %115, %116 : vector<1x8x8xf32>
    %cst_52 = arith.constant dense<0xFF800000> : vector<1x8xf32>
    %118 = vector.multi_reduction <maximumf>, %117, %cst_52 [2] : vector<1x8x8xf32> to vector<1x8xf32>
    %119 = vector.shape_cast %118 : vector<1x8xf32> to vector<1x8x1xf32>
    %120 = vector.broadcast %119 : vector<1x8x1xf32> to vector<1x8x8xf32>
    %121 = arith.subf %117, %120 : vector<1x8x8xf32>
    %122 = math.exp %121 : vector<1x8x8xf32>
    %cst_53 = arith.constant dense<0.000000e+00> : vector<1x8xf32>
    %123 = vector.multi_reduction <add>, %122, %cst_53 [2] : vector<1x8x8xf32> to vector<1x8xf32>
    %124 = vector.shape_cast %123 : vector<1x8xf32> to vector<1x8x1xf32>
    %125 = tpu.reciprocal %124 : vector<1x8x1xf32> -> vector<1x8x1xf32>
    %126 = vector.broadcast %125 : vector<1x8x1xf32> to vector<1x8x8xf32>
    %127 = arith.mulf %122, %126 : vector<1x8x8xf32>
    %c3 = arith.constant 3 : index
    %c0_54 = arith.constant 0 : index
    %c0_55 = arith.constant 0 : index
    %c0_56 = arith.constant 0 : index
    %128 = vector.load %arg17[%c3, %c0_54, %c0_55, %c0_56] : memref<4x1x8x8xf32, #tpu.memory_space<vmem>>, vector<1x1x8x8xf32>
    %129 = vector.shape_cast %128 : vector<1x1x8x8xf32> to vector<1x8x8xf32>
    %130 = vector.shape_cast %127 : vector<1x8x8xf32> to vector<1x1x8x8xf32>
    tpu.vector_store %arg17[%c3, %c0_54, %c0_55, %c0_56], %130 {strides = array<i32>} : memref<4x1x8x8xf32, #tpu.memory_space<vmem>>, vector<1x1x8x8xf32>,
    "tpu.trace_start"() <{level = 10 : i32, message = "bqk,bkd->bqd"}> : () -> ()
    %cst_57 = arith.constant dense<0.000000e+00> : vector<1x8x8xf32>
    %131 = tpu.matmul %127, %112, %cst_57 {dimension_numbers = #tpu.dot_dimension_numbers<[2], [1], [1], [2], [0, 0, 0, 1, 1, 2], [0], [0]>} : vector<1x8x8xf32>, vector<1x8x8xf32>, vector<1x8x8xf32> -> vector<1x8x8xf32>
    "tpu.trace_stop"() : () -> ()
    %132 = vector.shape_cast %131 : vector<1x8x8xf32> to vector<8x8xf32>
    %c3_58 = arith.constant 3 : index
    %c0_59 = arith.constant 0 : index
    %c0_60 = arith.constant 0 : index
    %133 = vector.load %arg6[%c3_58, %c0_59, %c0_60] : memref<4x8x32xf32, #tpu.memory_space<vmem>>, vector<1x8x32xf32>
    %134 = vector.shape_cast %133 : vector<1x8x32xf32> to vector<8x32xf32>
    %cst_61 = arith.constant dense<0.000000e+00> : vector<8x32xf32>
    %135 = tpu.matmul %132, %134, %cst_61 {dimension_numbers = #tpu.dot_dimension_numbers<[1], [0], [0], [1], [0, 0, 1, 1], [], []>} : vector<8x8xf32>, vector<8x32xf32>, vector<8x32xf32> -> vector<8x32xf32>
    %136 = arith.addf %106, %135 : vector<8x32xf32>
    %c0_62 = arith.constant 0 : index
    %c0_63 = arith.constant 0 : index
    %137 = vector.load %arg7[%c0_62, %c0_63] : memref<1x32xf32, #tpu.memory_space<vmem>>, vector<1x32xf32>
    %138 = vector.broadcast %137 : vector<1x32xf32> to vector<8x32xf32>
    %139 = arith.addf %136, %138 : vector<8x32xf32>
    %140 = arith.addf %139, %1 : vector<8x32xf32>
    %cst_64 = arith.constant dense<0.000000e+00> : vector<8xf32>
    %141 = vector.multi_reduction <add>, %140, %cst_64 [1] : vector<8x32xf32> to vector<8xf32>
    %142 = vector.shape_cast %141 : vector<8xf32> to vector<8x1xf32>
    %cst_65 = arith.constant 3.200000e+01 : f32
    %143 = vector.broadcast %cst_65 : f32 to vector<8x1xf32>
    %144 = arith.divf %142, %143 : vector<8x1xf32>
    %145 = vector.broadcast %144 : vector<8x1xf32> to vector<8x32xf32>
    %146 = arith.subf %140, %145 : vector<8x32xf32>
    %147 = arith.mulf %146, %146 : vector<8x32xf32>
    %cst_66 = arith.constant dense<0.000000e+00> : vector<8xf32>
    %148 = vector.multi_reduction <add>, %147, %cst_66 [1] : vector<8x32xf32> to vector<8xf32>
    %149 = vector.shape_cast %148 : vector<8xf32> to vector<8x1xf32>
    %cst_67 = arith.constant 3.200000e+01 : f32
    %150 = vector.broadcast %cst_67 : f32 to vector<8x1xf32>
    %151 = arith.divf %149, %150 : vector<8x1xf32>
    %152 = vector.broadcast %144 : vector<8x1xf32> to vector<8x32xf32>
    %153 = arith.subf %140, %152 : vector<8x32xf32>
    %cst_68 = arith.constant 9.99999974E-6 : f32
    %154 = vector.broadcast %cst_68 : f32 to vector<8x1xf32>
    %155 = arith.addf %151, %154 : vector<8x1xf32>
    %156 = math.rsqrt %155 : vector<8x1xf32>
    %157 = vector.broadcast %156 : vector<8x1xf32> to vector<8x32xf32>
    %158 = arith.mulf %153, %157 : vector<8x32xf32>
    %c0_69 = arith.constant 0 : index
    %c0_70 = arith.constant 0 : index
    %159 = vector.load %arg8[%c0_69, %c0_70] : memref<1x32xf32, #tpu.memory_space<vmem>>, vector<1x32xf32>
    %160 = vector.broadcast %159 : vector<1x32xf32> to vector<8x32xf32>
    %161 = arith.mulf %158, %160 : vector<8x32xf32>
    %c0_71 = arith.constant 0 : index
    %c0_72 = arith.constant 0 : index
    %162 = vector.load %arg9[%c0_71, %c0_72] : memref<1x32xf32, #tpu.memory_space<vmem>>, vector<1x32xf32>
    %163 = vector.broadcast %162 : vector<1x32xf32> to vector<8x32xf32>
    %164 = arith.addf %161, %163 : vector<8x32xf32>
    %c0_73 = arith.constant 0 : index
    %c0_74 = arith.constant 0 : index
    %c0_75 = arith.constant 0 : index
    %165 = vector.load %arg2[%c0_73, %c0_74, %c0_75] : memref<1x8x1xf32, #tpu.memory_space<vmem>>, vector<1x8x1xf32>
    %166 = vector.shape_cast %165 : vector<1x8x1xf32> to vector<8x1xf32>
    %167 = vector.broadcast %166 : vector<8x1xf32> to vector<8x32xf32>
    %168 = arith.mulf %164, %167 : vector<8x32xf32>
    %c0_76 = arith.constant 0 : index
    %c0_77 = arith.constant 0 : index
    %169 = vector.load %arg10[%c0_76, %c0_77] : memref<32x64xf32, #tpu.memory_space<vmem>>, vector<32x64xf32>
    %cst_78 = arith.constant dense<0.000000e+00> : vector<8x64xf32>
    %170 = tpu.matmul %168, %169, %cst_78 {dimension_numbers = #tpu.dot_dimension_numbers<[1], [0], [0], [1], [0, 0, 1, 1], [], []>} : vector<8x32xf32>, vector<32x64xf32>, vector<8x64xf32> -> vector<8x64xf32>
    %c0_79 = arith.constant 0 : index
    %c0_80 = arith.constant 0 : index
    %171 = vector.load %arg11[%c0_79, %c0_80] : memref<1x64xf32, #tpu.memory_space<vmem>>, vector<1x64xf32>
    %172 = vector.broadcast %171 : vector<1x64xf32> to vector<8x64xf32>
    %173 = arith.addf %170, %172 : vector<8x64xf32>
    %cst_81 = arith.constant 0.000000e+00 : f32
    %174 = vector.broadcast %cst_81 : f32 to vector<8x64xf32>
    %175 = arith.maximumf %173, %174 : vector<8x64xf32>
    %c0_82 = arith.constant 0 : index
    %c0_83 = arith.constant 0 : index
    %176 = vector.load %arg12[%c0_82, %c0_83] : memref<64x32xf32, #tpu.memory_space<vmem>>, vector<64x32xf32>
    %cst_84 = arith.constant dense<0.000000e+00> : vector<8x32xf32>
    %177 = tpu.matmul %175, %176, %cst_84 {dimension_numbers = #tpu.dot_dimension_numbers<[1], [0], [0], [1], [0, 0, 1, 1], [], []>} : vector<8x64xf32>, vector<64x32xf32>, vector<8x32xf32> -> vector<8x32xf32>
    %c0_85 = arith.constant 0 : index
    %c0_86 = arith.constant 0 : index
    %178 = vector.load %arg13[%c0_85, %c0_86] : memref<1x32xf32, #tpu.memory_space<vmem>>, vector<1x32xf32>
    %179 = vector.broadcast %178 : vector<1x32xf32> to vector<8x32xf32>
    %180 = arith.addf %177, %179 : vector<8x32xf32>
    %181 = arith.addf %180, %168 : vector<8x32xf32>
    %cst_87 = arith.constant dense<0.000000e+00> : vector<8xf32>
    %182 = vector.multi_reduction <add>, %181, %cst_87 [1] : vector<8x32xf32> to vector<8xf32>
    %183 = vector.shape_cast %182 : vector<8xf32> to vector<8x1xf32>
    %cst_88 = arith.constant 3.200000e+01 : f32
    %184 = vector.broadcast %cst_88 : f32 to vector<8x1xf32>
    %185 = arith.divf %183, %184 : vector<8x1xf32>
    %186 = vector.broadcast %185 : vector<8x1xf32> to vector<8x32xf32>
    %187 = arith.subf %181, %186 : vector<8x32xf32>
    %188 = arith.mulf %187, %187 : vector<8x32xf32>
    %cst_89 = arith.constant dense<0.000000e+00> : vector<8xf32>
    %189 = vector.multi_reduction <add>, %188, %cst_89 [1] : vector<8x32xf32> to vector<8xf32>
    %190 = vector.shape_cast %189 : vector<8xf32> to vector<8x1xf32>
    %cst_90 = arith.constant 3.200000e+01 : f32
    %191 = vector.broadcast %cst_90 : f32 to vector<8x1xf32>
    %192 = arith.divf %190, %191 : vector<8x1xf32>
    %193 = vector.broadcast %185 : vector<8x1xf32> to vector<8x32xf32>
    %194 = arith.subf %181, %193 : vector<8x32xf32>
    %cst_91 = arith.constant 9.99999974E-6 : f32
    %195 = vector.broadcast %cst_91 : f32 to vector<8x1xf32>
    %196 = arith.addf %192, %195 : vector<8x1xf32>
    %197 = math.rsqrt %196 : vector<8x1xf32>
    %198 = vector.broadcast %197 : vector<8x1xf32> to vector<8x32xf32>
    %199 = arith.mulf %194, %198 : vector<8x32xf32>
    %c0_92 = arith.constant 0 : index
    %c0_93 = arith.constant 0 : index
    %200 = vector.load %arg14[%c0_92, %c0_93] : memref<1x32xf32, #tpu.memory_space<vmem>>, vector<1x32xf32>
    %201 = vector.broadcast %200 : vector<1x32xf32> to vector<8x32xf32>
    %202 = arith.mulf %199, %201 : vector<8x32xf32>
    %c0_94 = arith.constant 0 : index
    %c0_95 = arith.constant 0 : index
    %203 = vector.load %arg15[%c0_94, %c0_95] : memref<1x32xf32, #tpu.memory_space<vmem>>, vector<1x32xf32>
    %204 = vector.broadcast %203 : vector<1x32xf32> to vector<8x32xf32>
    %205 = arith.addf %202, %204 : vector<8x32xf32>
    %206 = vector.broadcast %166 : vector<8x1xf32> to vector<8x32xf32>
    %207 = arith.mulf %205, %206 : vector<8x32xf32>
    %208 = vector.shape_cast %207 : vector<8x32xf32> to vector<1x8x32xf32>
    %c0_96 = arith.constant 0 : index
    %c0_97 = arith.constant 0 : index
    %c0_98 = arith.constant 0 : index
    %209 = vector.load %arg16[%c0_96, %c0_97, %c0_98] : memref<1x8x32xf32, #tpu.memory_space<vmem>>, vector<1x8x32xf32>
    tpu.vector_store %arg16[%c0_96, %c0_97, %c0_98], %208 {strides = array<i32>} : memref<1x8x32xf32, #tpu.memory_space<vmem>>, vector<1x8x32xf32>,
    return
  }
  func.func @transform_0(%arg0: i32) -> (i32, i32, i32) {
    %c0_i32 = arith.constant 0 : i32
    %c0_i32_0 = arith.constant 0 : i32
    %c0_i32_1 = arith.constant 0 : i32
    return %arg0, %c0_i32, %c0_i32_0 : i32, i32, i32
  }
  func.func @transform_1(%arg0: i32) -> (i32, i32, i32) {
    %c0_i32 = arith.constant 0 : i32
    %c0_i32_0 = arith.constant 0 : i32
    %c0_i32_1 = arith.constant 0 : i32
    return %arg0, %c0_i32, %c0_i32_0 : i32, i32, i32
  }
  func.func @transform_2(%arg0: i32) -> (i32, i32, i32) {
    %c0_i32 = arith.constant 0 : i32
    %c0_i32_0 = arith.constant 0 : i32
    %c0_i32_1 = arith.constant 0 : i32
    return %arg0, %c0_i32, %c0_i32_0 : i32, i32, i32
  }
  func.func @transform_3(%arg0: i32) -> (i32, i32) {
    %c0_i32 = arith.constant 0 : i32
    %c0_i32_0 = arith.constant 0 : i32
    %c0_i32_1 = arith.constant 0 : i32
    return %c0_i32, %c0_i32_0 : i32, i32
  }
  func.func @transform_4(%arg0: i32) -> (i32, i32) {
    %c0_i32 = arith.constant 0 : i32
    %c0_i32_0 = arith.constant 0 : i32
    %c0_i32_1 = arith.constant 0 : i32
    return %c0_i32, %c0_i32_0 : i32, i32
  }
  func.func @transform_5(%arg0: i32) -> (i32, i32, i32) {
    %c0_i32 = arith.constant 0 : i32
    %c0_i32_0 = arith.constant 0 : i32
    %c0_i32_1 = arith.constant 0 : i32
    %c0_i32_2 = arith.constant 0 : i32
    return %c0_i32, %c0_i32_0, %c0_i32_1 : i32, i32, i32
  }
  func.func @transform_6(%arg0: i32) -> (i32, i32) {
    %c0_i32 = arith.constant 0 : i32
    %c0_i32_0 = arith.constant 0 : i32
    %c0_i32_1 = arith.constant 0 : i32
    return %c0_i32, %c0_i32_0 : i32, i32
  }
  func.func @transform_7(%arg0: i32) -> (i32, i32) {
    %c0_i32 = arith.constant 0 : i32
    %c0_i32_0 = arith.constant 0 : i32
    %c0_i32_1 = arith.constant 0 : i32
    return %c0_i32, %c0_i32_0 : i32, i32
  }
  func.func @transform_8(%arg0: i32) -> (i32, i32) {
    %c0_i32 = arith.constant 0 : i32
    %c0_i32_0 = arith.constant 0 : i32
    %c0_i32_1 = arith.constant 0 : i32
    return %c0_i32, %c0_i32_0 : i32, i32
  }
  func.func @transform_9(%arg0: i32) -> (i32, i32) {
    %c0_i32 = arith.constant 0 : i32
    %c0_i32_0 = arith.constant 0 : i32
    %c0_i32_1 = arith.constant 0 : i32
    return %c0_i32, %c0_i32_0 : i32, i32
  }
  func.func @transform_10(%arg0: i32) -> (i32, i32) {
    %c0_i32 = arith.constant 0 : i32
    %c0_i32_0 = arith.constant 0 : i32
    %c0_i32_1 = arith.constant 0 : i32
    return %c0_i32, %c0_i32_0 : i32, i32
  }
  func.func @transform_11(%arg0: i32) -> (i32, i32) {
    %c0_i32 = arith.constant 0 : i32
    %c0_i32_0 = arith.constant 0 : i32
    %c0_i32_1 = arith.constant 0 : i32
    return %c0_i32, %c0_i32_0 : i32, i32
  }
  func.func @transform_12(%arg0: i32) -> (i32, i32) {
    %c0_i32 = arith.constant 0 : i32
    %c0_i32_0 = arith.constant 0 : i32
    %c0_i32_1 = arith.constant 0 : i32
    return %c0_i32, %c0_i32_0 : i32, i32
  }
  func.func @transform_13(%arg0: i32) -> (i32, i32) {
    %c0_i32 = arith.constant 0 : i32
    %c0_i32_0 = arith.constant 0 : i32
    %c0_i32_1 = arith.constant 0 : i32
    return %c0_i32, %c0_i32_0 : i32, i32
  }
  func.func @transform_14(%arg0: i32) -> (i32, i32) {
    %c0_i32 = arith.constant 0 : i32
    %c0_i32_0 = arith.constant 0 : i32
    %c0_i32_1 = arith.constant 0 : i32
    return %c0_i32, %c0_i32_0 : i32, i32
  }
  func.func @transform_15(%arg0: i32) -> (i32, i32, i32) {
    %c0_i32 = arith.constant 0 : i32
    %c0_i32_0 = arith.constant 0 : i32
    %c0_i32_1 = arith.constant 0 : i32
    return %arg0, %c0_i32, %c0_i32_0 : i32, i32, i32
  }
  func.func @transform_16(%arg0: i32) -> (i32, i32, i32, i32) {
    %c0_i32 = arith.constant 0 : i32
    %c0_i32_0 = arith.constant 0 : i32
    %c0_i32_1 = arith.constant 0 : i32
    %c0_i32_2 = arith.constant 0 : i32
    return %c0_i32, %arg0, %c0_i32_0, %c0_i32_1 : i32, i32, i32, i32
  }
}

</mosaic_0001>

<llo_original>
// kernel: tpu_custom_call.1
$region0: #{tpu_custom_call.1}
  #allocation0 [shape = 'u32[]', space=smem, size = 0x4, offset = 0x4, fixed_abs, tag = 'smem constant byte address 0x4 - core index']
  #allocation1 [shape = 'u32[144,128]{1,0:T(1,128)}', space=vmem, size = 0x12000, scoped, tag = 'internal scratch']
  %s0 = inlined_call_operand.vmem [shape: f32[2,8,32], index: 0, kind: input, shape index: {}]
  %s1 = inlined_call_operand.vmem [shape: f32[2,8,1], index: 1, kind: input, shape index: {}]
  %s2 = inlined_call_operand.vmem [shape: f32[2,1,8], index: 2, kind: input, shape index: {}]
  %s3 = inlined_call_operand.vmem [shape: f32[32,96], index: 3, kind: input, shape index: {}]
  %s4 = inlined_call_operand.vmem [shape: f32[1,96], index: 4, kind: input, shape index: {}]
  %s5 = inlined_call_operand.vmem [shape: f32[4,8,32], index: 5, kind: input, shape index: {}]
  %s6 = inlined_call_operand.vmem [shape: f32[1,32], index: 6, kind: input, shape index: {}]
  %s7 = inlined_call_operand.vmem [shape: f32[1,32], index: 7, kind: input, shape index: {}]
  %s8 = inlined_call_operand.vmem [shape: f32[1,32], index: 8, kind: input, shape index: {}]
  %s9 = inlined_call_operand.vmem [shape: f32[32,64], index: 9, kind: input, shape index: {}]
  %s10 = inlined_call_operand.vmem [shape: f32[1,64], index: 10, kind: input, shape index: {}]
  %s11 = inlined_call_operand.vmem [shape: f32[64,32], index: 11, kind: input, shape index: {}]
  %s12 = inlined_call_operand.vmem [shape: f32[1,32], index: 12, kind: input, shape index: {}]
  %s13 = inlined_call_operand.vmem [shape: f32[1,32], index: 13, kind: input, shape index: {}]
  %s14 = inlined_call_operand.vmem [shape: f32[1,32], index: 14, kind: input, shape index: {}]
  %s15 = inlined_call_operand.hbm [shape: f32[2,8,32], index: 15, kind: output, shape index: {0}]
  %s16 = inlined_call_operand.hbm [shape: f32[4,2,8,8], index: 16, kind: output, shape index: {1}]
  %17 = xla_tuple %s15, %s16
  %s18 = sld [smem:[#allocation0]]
  $region101: #{tpu_custom_call.1} parent=0
    _
  %s20 = ssub.s32 1, %s18
  %s21 = scalar_select 0, %s20, %s18
  $region1: #{tpu_custom_call.1} parent=0
    #allocation2 [shape = 'u8[8192]{0}', space=vmem, size = 0x2000, scoped, tag = 'output window, operand 0']
    #allocation3 [shape = 's32[2]{0}', space=sflag, size = 0x8, scoped, tag = 'scoped memory for tpu_custom_call.1']
    #allocation4 [shape = 'u8[32768]{0}', space=vmem, size = 0x8000, scoped, tag = 'output window, operand 1']
    #allocation5 [shape = 's32[2]{0}', space=sflag, size = 0x8, scoped, tag = 'scoped memory for tpu_custom_call.1']
    %22 = vsyncpa [#allocation3], 0
    %s23 = scalar_lea.sflag [#allocation3], 1
    %24 = vsyncpa %s23, 0
    %25 = vsyncpa [#allocation5], 0
    %s26 = scalar_lea.sflag [#allocation5], 1
    %27 = vsyncpa %s26, 0
    loop: start=0, step=1, limit=4
    $region2: #{tpu_custom_call.1} parent=1 // loop_pre_header
      _
    $region3: #{tpu_custom_call.1} parent=1 // loop_header
      %s29 = sphi 0, %s33
      %p30 = scmp.ge.s32.totalorder %s29, 4
      %s39 = sphi 0, %s41
      %s42 = sphi 0, %s39
      %s43 = sphi 0, %s42
      %s59 = sphi 0, %s43
      %s65 = sphi 0, %s67
      %s68 = sphi 0, %s65
      %s69 = sphi 0, %s68
      %s85 = sphi 0, %s69
      %s91 = sphi 0, %s93
      %s94 = sphi 0, %s91
      %s95 = sphi 0, %s94
      %s111 = sphi 0, %s95
      %s115 = sphi 0, %s115
      %s117 = sphi 0, %s115
      %s118 = sphi 0, %s117
      %s132 = sphi 0, %s118
      %s136 = sphi 0, %s136
      %s138 = sphi 0, %s136
      %s139 = sphi 0, %s138
      %s153 = sphi 0, %s139
      %s157 = sphi 0, %s157
      %s159 = sphi 0, %s157
      %s160 = sphi 0, %s159
      %s174 = sphi 0, %s160
      %s178 = sphi 0, %s178
      %s180 = sphi 0, %s178
      %s181 = sphi 0, %s180
      %s195 = sphi 0, %s181
      %s199 = sphi 0, %s199
      %s201 = sphi 0, %s199
      %s202 = sphi 0, %s201
      %s216 = sphi 0, %s202
      %s220 = sphi 0, %s220
      %s222 = sphi 0, %s220
      %s223 = sphi 0, %s222
      %s237 = sphi 0, %s223
      %s241 = sphi 0, %s241
      %s243 = sphi 0, %s241
      %s244 = sphi 0, %s243
      %s258 = sphi 0, %s244
      %s262 = sphi 0, %s262
      %s264 = sphi 0, %s262
      %s265 = sphi 0, %s264
      %s279 = sphi 0, %s265
      %s283 = sphi 0, %s283
      %s285 = sphi 0, %s283
      %s286 = sphi 0, %s285
      %s300 = sphi 0, %s286
      %s304 = sphi 0, %s304
      %s306 = sphi 0, %s304
      %s307 = sphi 0, %s306
      %s321 = sphi 0, %s307
      %s325 = sphi 0, %s325
      %s327 = sphi 0, %s325
      %s328 = sphi 0, %s327
      %s342 = sphi 0, %s328
      %s346 = sphi 0, %s346
      %s348 = sphi 0, %s346
      %s349 = sphi 0, %s348
      %s363 = sphi 0, %s349
      %s369 = sphi 0, %s371
      %s372 = sphi 0, %s369
      %s373 = sphi 0, %s372
      %s389 = sphi 0, %s373
      %s395 = sphi 0, %s397
      %s398 = sphi 0, %s395
      %s399 = sphi 0, %s398
      %s415 = sphi 0, %s399
    $region4: #{tpu_custom_call.1} parent=1 // loop_header_branch
      %32 = sbr.rel (%p30) target = $region8
    $region5: #{tpu_custom_call.1} parent=1 // loop_body
      %s34 = ssub.s32 %s29, 1
      %s35 = ssub.s32 %s29, 2
      %s36 = sadd.s32 %s29, 1
      %s37 = ssub.s32 %s29, %s36
      %p38 = scmp.eq.s32.totalorder %s37, 0
      %s40 = sadd.s32 %s39, 1
      %s41 = scalar_select %p38, %s39, %s40
      %p44 = pneg %p38
      %p45 = scmp.eq.s32.totalorder %s29, 1
      %p46 = por %p44, %p45
      %p47 = scmp.ne.s32.totalorder %s39, %s42
      %p48 = scmp.eq.s32.totalorder %s29, 0
      %p49 = por %p47, %p48
      %p50 = scmp.ne.s32.totalorder %s39, %s42
      %p51 = scmp.eq.s32.totalorder %s34, 1
      %p52 = por %p50, %p51
      %p53 = scmp.ne.s32.totalorder %s42, %s43
      %p54 = scmp.eq.s32.totalorder %s34, 0
      %p55 = por %p53, %p54
      %p56 = scmp.ne.s32.totalorder %s42, %s43
      %p57 = scmp.eq.s32.totalorder %s35, 1
      %p58 = por %p56, %p57
      %p60 = scmp.ne.s32.totalorder %s43, %s59
      %p61 = scmp.eq.s32.totalorder %s35, 0
      %p62 = por %p60, %p61
      %s63 = ssub.s32 %s29, %s36
      %p64 = scmp.eq.s32.totalorder %s63, 0
      %s66 = sadd.s32 %s65, 1
      %s67 = scalar_select %p64, %s65, %s66
      %p70 = pneg %p64
      %p71 = scmp.eq.s32.totalorder %s29, 1
      %p72 = por %p70, %p71
      %p73 = scmp.ne.s32.totalorder %s65, %s68
      %p74 = scmp.eq.s32.totalorder %s29, 0
      %p75 = por %p73, %p74
      %p76 = scmp.ne.s32.totalorder %s65, %s68
      %p77 = scmp.eq.s32.totalorder %s34, 1
      %p78 = por %p76, %p77
      %p79 = scmp.ne.s32.totalorder %s68, %s69
      %p80 = scmp.eq.s32.totalorder %s34, 0
      %p81 = por %p79, %p80
      %p82 = scmp.ne.s32.totalorder %s68, %s69
      %p83 = scmp.eq.s32.totalorder %s35, 1
      %p84 = por %p82, %p83
      %p86 = scmp.ne.s32.totalorder %s69, %s85
      %p87 = scmp.eq.s32.totalorder %s35, 0
      %p88 = por %p86, %p87
      %s89 = ssub.s32 %s29, %s36
      %p90 = scmp.eq.s32.totalorder %s89, 0
      %s92 = sadd.s32 %s91, 1
      %s93 = scalar_select %p90, %s91, %s92
      %p96 = pneg %p90
      %p97 = scmp.eq.s32.totalorder %s29, 1
      %p98 = por %p96, %p97
      %p99 = scmp.ne.s32.totalorder %s91, %s94
      %p100 = scmp.eq.s32.totalorder %s29, 0
      %p101 = por %p99, %p100
      %p102 = scmp.ne.s32.totalorder %s91, %s94
      %p103 = scmp.eq.s32.totalorder %s34, 1
      %p104 = por %p102, %p103
      %p105 = scmp.ne.s32.totalorder %s94, %s95
      %p106 = scmp.eq.s32.totalorder %s34, 0
      %p107 = por %p105, %p106
      %p108 = scmp.ne.s32.totalorder %s94, %s95
      %p109 = scmp.eq.s32.totalorder %s35, 1
      %p110 = por %p108, %p109
      %p112 = scmp.ne.s32.totalorder %s95, %s111
      %p113 = scmp.eq.s32.totalorder %s35, 0
      %p114 = por %p112, %p113
      %s116 = sadd.s32 %s115, 1
      %p119 = scmp.eq.s32.totalorder %s29, 1
      %p120 = scmp.ne.s32.totalorder %s115, %s117
      %p121 = scmp.eq.s32.totalorder %s29, 0
      %p122 = por %p120, %p121
      %p123 = scmp.ne.s32.totalorder %s115, %s117
      %p124 = scmp.eq.s32.totalorder %s34, 1
      %p125 = por %p123, %p124
      %p126 = scmp.ne.s32.totalorder %s117, %s118
      %p127 = scmp.eq.s32.totalorder %s34, 0
      %p128 = por %p126, %p127
      %p129 = scmp.ne.s32.totalorder %s117, %s118
      %p130 = scmp.eq.s32.totalorder %s35, 1
      %p131 = por %p129, %p130
      %p133 = scmp.ne.s32.totalorder %s118, %s132
      %p134 = scmp.eq.s32.totalorder %s35, 0
      %p135 = por %p133, %p134
      %s137 = sadd.s32 %s136, 1
      %p140 = scmp.eq.s32.totalorder %s29, 1
      %p141 = scmp.ne.s32.totalorder %s136, %s138
      %p142 = scmp.eq.s32.totalorder %s29, 0
      %p143 = por %p141, %p142
      %p144 = scmp.ne.s32.totalorder %s136, %s138
      %p145 = scmp.eq.s32.totalorder %s34, 1
      %p146 = por %p144, %p145
      %p147 = scmp.ne.s32.totalorder %s138, %s139
      %p148 = scmp.eq.s32.totalorder %s34, 0
      %p149 = por %p147, %p148
      %p150 = scmp.ne.s32.totalorder %s138, %s139
      %p151 = scmp.eq.s32.totalorder %s35, 1
      %p152 = por %p150, %p151
      %p154 = scmp.ne.s32.totalorder %s139, %s153
      %p155 = scmp.eq.s32.totalorder %s35, 0
      %p156 = por %p154, %p155
      %s158 = sadd.s32 %s157, 1
      %p161 = scmp.eq.s32.totalorder %s29, 1
      %p162 = scmp.ne.s32.totalorder %s157, %s159
      %p163 = scmp.eq.s32.totalorder %s29, 0
      %p164 = por %p162, %p163
      %p165 = scmp.ne.s32.totalorder %s157, %s159
      %p166 = scmp.eq.s32.totalorder %s34, 1
      %p167 = por %p165, %p166
      %p168 = scmp.ne.s32.totalorder %s159, %s160
      %p169 = scmp.eq.s32.totalorder %s34, 0
      %p170 = por %p168, %p169
      %p171 = scmp.ne.s32.totalorder %s159, %s160
      %p172 = scmp.eq.s32.totalorder %s35, 1
      %p173 = por %p171, %p172
      %p175 = scmp.ne.s32.totalorder %s160, %s174
      %p176 = scmp.eq.s32.totalorder %s35, 0
      %p177 = por %p175, %p176
      %s179 = sadd.s32 %s178, 1
      %p182 = scmp.eq.s32.totalorder %s29, 1
      %p183 = scmp.ne.s32.totalorder %s178, %s180
      %p184 = scmp.eq.s32.totalorder %s29, 0
      %p185 = por %p183, %p184
      %p186 = scmp.ne.s32.totalorder %s178, %s180
      %p187 = scmp.eq.s32.totalorder %s34, 1
      %p188 = por %p186, %p187
      %p189 = scmp.ne.s32.totalorder %s180, %s181
      %p190 = scmp.eq.s32.totalorder %s34, 0
      %p191 = por %p189, %p190
      %p192 = scmp.ne.s32.totalorder %s180, %s181
      %p193 = scmp.eq.s32.totalorder %s35, 1
      %p194 = por %p192, %p193
      %p196 = scmp.ne.s32.totalorder %s181, %s195
      %p197 = scmp.eq.s32.totalorder %s35, 0
      %p198 = por %p196, %p197
      %s200 = sadd.s32 %s199, 1
      %p203 = scmp.eq.s32.totalorder %s29, 1
      %p204 = scmp.ne.s32.totalorder %s199, %s201
      %p205 = scmp.eq.s32.totalorder %s29, 0
      %p206 = por %p204, %p205
      %p207 = scmp.ne.s32.totalorder %s199, %s201
      %p208 = scmp.eq.s32.totalorder %s34, 1
      %p209 = por %p207, %p208
      %p210 = scmp.ne.s32.totalorder %s201, %s202
      %p211 = scmp.eq.s32.totalorder %s34, 0
      %p212 = por %p210, %p211
      %p213 = scmp.ne.s32.totalorder %s201, %s202
      %p214 = scmp.eq.s32.totalorder %s35, 1
      %p215 = por %p213, %p214
      %p217 = scmp.ne.s32.totalorder %s202, %s216
      %p218 = scmp.eq.s32.totalorder %s35, 0
      %p219 = por %p217, %p218
      %s221 = sadd.s32 %s220, 1
      %p224 = scmp.eq.s32.totalorder %s29, 1
      %p225 = scmp.ne.s32.totalorder %s220, %s222
      %p226 = scmp.eq.s32.totalorder %s29, 0
      %p227 = por %p225, %p226
      %p228 = scmp.ne.s32.totalorder %s220, %s222
      %p229 = scmp.eq.s32.totalorder %s34, 1
      %p230 = por %p228, %p229
      %p231 = scmp.ne.s32.totalorder %s222, %s223
      %p232 = scmp.eq.s32.totalorder %s34, 0
      %p233 = por %p231, %p232
      %p234 = scmp.ne.s32.totalorder %s222, %s223
      %p235 = scmp.eq.s32.totalorder %s35, 1
      %p236 = por %p234, %p235
      %p238 = scmp.ne.s32.totalorder %s223, %s237
      %p239 = scmp.eq.s32.totalorder %s35, 0
      %p240 = por %p238, %p239
      %s242 = sadd.s32 %s241, 1
      %p245 = scmp.eq.s32.totalorder %s29, 1
      %p246 = scmp.ne.s32.totalorder %s241, %s243
      %p247 = scmp.eq.s32.totalorder %s29, 0
      %p248 = por %p246, %p247
      %p249 = scmp.ne.s32.totalorder %s241, %s243
      %p250 = scmp.eq.s32.totalorder %s34, 1
      %p251 = por %p249, %p250
      %p252 = scmp.ne.s32.totalorder %s243, %s244
      %p253 = scmp.eq.s32.totalorder %s34, 0
      %p254 = por %p252, %p253
      %p255 = scmp.ne.s32.totalorder %s243, %s244
      %p256 = scmp.eq.s32.totalorder %s35, 1
      %p257 = por %p255, %p256
      %p259 = scmp.ne.s32.totalorder %s244, %s258
      %p260 = scmp.eq.s32.totalorder %s35, 0
      %p261 = por %p259, %p260
      %s263 = sadd.s32 %s262, 1
      %p266 = scmp.eq.s32.totalorder %s29, 1
      %p267 = scmp.ne.s32.totalorder %s262, %s264
      %p268 = scmp.eq.s32.totalorder %s29, 0
      %p269 = por %p267, %p268
      %p270 = scmp.ne.s32.totalorder %s262, %s264
      %p271 = scmp.eq.s32.totalorder %s34, 1
      %p272 = por %p270, %p271
      %p273 = scmp.ne.s32.totalorder %s264, %s265
      %p274 = scmp.eq.s32.totalorder %s34, 0
      %p275 = por %p273, %p274
      %p276 = scmp.ne.s32.totalorder %s264, %s265
      %p277 = scmp.eq.s32.totalorder %s35, 1
      %p278 = por %p276, %p277
      %p280 = scmp.ne.s32.totalorder %s265, %s279
      %p281 = scmp.eq.s32.totalorder %s35, 0
      %p282 = por %p280, %p281
      %s284 = sadd.s32 %s283, 1
      %p287 = scmp.eq.s32.totalorder %s29, 1
      %p288 = scmp.ne.s32.totalorder %s283, %s285
      %p289 = scmp.eq.s32.totalorder %s29, 0
      %p290 = por %p288, %p289
      %p291 = scmp.ne.s32.totalorder %s283, %s285
      %p292 = scmp.eq.s32.totalorder %s34, 1
      %p293 = por %p291, %p292
      %p294 = scmp.ne.s32.totalorder %s285, %s286
      %p295 = scmp.eq.s32.totalorder %s34, 0
      %p296 = por %p294, %p295
      %p297 = scmp.ne.s32.totalorder %s285, %s286
      %p298 = scmp.eq.s32.totalorder %s35, 1
      %p299 = por %p297, %p298
      %p301 = scmp.ne.s32.totalorder %s286, %s300
      %p302 = scmp.eq.s32.totalorder %s35, 0
      %p303 = por %p301, %p302
      %s305 = sadd.s32 %s304, 1
      %p308 = scmp.eq.s32.totalorder %s29, 1
      %p309 = scmp.ne.s32.totalorder %s304, %s306
      %p310 = scmp.eq.s32.totalorder %s29, 0
      %p311 = por %p309, %p310
      %p312 = scmp.ne.s32.totalorder %s304, %s306
      %p313 = scmp.eq.s32.totalorder %s34, 1
      %p314 = por %p312, %p313
      %p315 = scmp.ne.s32.totalorder %s306, %s307
      %p316 = scmp.eq.s32.totalorder %s34, 0
      %p317 = por %p315, %p316
      %p318 = scmp.ne.s32.totalorder %s306, %s307
      %p319 = scmp.eq.s32.totalorder %s35, 1
      %p320 = por %p318, %p319
      %p322 = scmp.ne.s32.totalorder %s307, %s321
      %p323 = scmp.eq.s32.totalorder %s35, 0
      %p324 = por %p322, %p323
      %s326 = sadd.s32 %s325, 1
      %p329 = scmp.eq.s32.totalorder %s29, 1
      %p330 = scmp.ne.s32.totalorder %s325, %s327
      %p331 = scmp.eq.s32.totalorder %s29, 0
      %p332 = por %p330, %p331
      %p333 = scmp.ne.s32.totalorder %s325, %s327
      %p334 = scmp.eq.s32.totalorder %s34, 1
      %p335 = por %p333, %p334
      %p336 = scmp.ne.s32.totalorder %s327, %s328
      %p337 = scmp.eq.s32.totalorder %s34, 0
      %p338 = por %p336, %p337
      %p339 = scmp.ne.s32.totalorder %s327, %s328
      %p340 = scmp.eq.s32.totalorder %s35, 1
      %p341 = por %p339, %p340
      %p343 = scmp.ne.s32.totalorder %s328, %s342
      %p344 = scmp.eq.s32.totalorder %s35, 0
      %p345 = por %p343, %p344
      %s347 = sadd.s32 %s346, 1
      %p350 = scmp.eq.s32.totalorder %s29, 1
      %p351 = scmp.ne.s32.totalorder %s346, %s348
      %p352 = scmp.eq.s32.totalorder %s29, 0
      %p353 = por %p351, %p352
      %p354 = scmp.ne.s32.totalorder %s346, %s348
      %p355 = scmp.eq.s32.totalorder %s34, 1
      %p356 = por %p354, %p355
      %p357 = scmp.ne.s32.totalorder %s348, %s349
      %p358 = scmp.eq.s32.totalorder %s34, 0
      %p359 = por %p357, %p358
      %p360 = scmp.ne.s32.totalorder %s348, %s349
      %p361 = scmp.eq.s32.totalorder %s35, 1
      %p362 = por %p360, %p361
      %p364 = scmp.ne.s32.totalorder %s349, %s363
      %p365 = scmp.eq.s32.totalorder %s35, 0
      %p366 = por %p364, %p365
      %s367 = ssub.s32 %s29, %s36
      %p368 = scmp.eq.s32.totalorder %s367, 0
      %s370 = sadd.s32 %s369, 1
      %s371 = scalar_select %p368, %s369, %s370
      %p374 = pneg %p368
      %p375 = scmp.eq.s32.totalorder %s29, 1
      %p376 = por %p374, %p375
      %p377 = scmp.ne.s32.totalorder %s369, %s372
      %p378 = scmp.eq.s32.totalorder %s29, 0
      %p379 = por %p377, %p378
      %p380 = scmp.ne.s32.totalorder %s369, %s372
      %p381 = scmp.eq.s32.totalorder %s34, 1
      %p382 = por %p380, %p381
      %p383 = scmp.ne.s32.totalorder %s372, %s373
      %p384 = scmp.eq.s32.totalorder %s34, 0
      %p385 = por %p383, %p384
      %p386 = scmp.ne.s32.totalorder %s372, %s373
      %p387 = scmp.eq.s32.totalorder %s35, 1
      %p388 = por %p386, %p387
      %p390 = scmp.ne.s32.totalorder %s373, %s389
      %p391 = scmp.eq.s32.totalorder %s35, 0
      %p392 = por %p390, %p391
      %s393 = ssub.s32 %s29, %s36
      %p394 = scmp.eq.s32.totalorder %s393, 0
      %s396 = sadd.s32 %s395, 1
      %s397 = scalar_select %p394, %s395, %s396
      %p400 = pneg %p394
      %p401 = scmp.eq.s32.totalorder %s29, 1
      %p402 = por %p400, %p401
      %p403 = scmp.ne.s32.totalorder %s395, %s398
      %p404 = scmp.eq.s32.totalorder %s29, 0
      %p405 = por %p403, %p404
      %p406 = scmp.ne.s32.totalorder %s395, %s398
      %p407 = scmp.eq.s32.totalorder %s34, 1
      %p408 = por %p406, %p407
      %p409 = scmp.ne.s32.totalorder %s398, %s399
      %p410 = scmp.eq.s32.totalorder %s34, 0
      %p411 = por %p409, %p410
      %p412 = scmp.ne.s32.totalorder %s398, %s399
      %p413 = scmp.eq.s32.totalorder %s35, 1
      %p414 = por %p412, %p413
      %p416 = scmp.ne.s32.totalorder %s399, %s415
      %p417 = scmp.eq.s32.totalorder %s35, 0
      %p418 = por %p416, %p417
      %p419 = scmp.le.s32.totalorder 1, %s29
      %p420 = scmp.lt.s32.totalorder %s29, 3
      %p421 = pnand %p419, %p420
      %p422 = pneg %p421
      // Predicated region
      $region9: #{tpu_custom_call.1} parent=5 // pred_check
        _
      $region10: #{tpu_custom_call.1} parent=5 // pred_check_branch
        %424 = sbr.rel (%p421) target = $region12
      $region11: #{tpu_custom_call.1} parent=5 // pred_region
        %s425 = ssub.s32 %s29, 1
        // Predicated region
        $region13: #{tpu_custom_call.1} parent=11 // pred_check
          %p426 = pneg %p128
        $region14: #{tpu_custom_call.1} parent=11 // pred_check_branch
          %428 = sbr.rel (%p426) target = $region16
        $region15: #{tpu_custom_call.1} parent=11 // pred_region
          _
        $region16: #{tpu_custom_call.1} parent=11 // pred_fallthru
          _
        // Predicated region
        $region17: #{tpu_custom_call.1} parent=11 // pred_check
          %p429 = pneg %p149
        $region18: #{tpu_custom_call.1} parent=11 // pred_check_branch
          %431 = sbr.rel (%p429) target = $region20
        $region19: #{tpu_custom_call.1} parent=11 // pred_region
          _
        $region20: #{tpu_custom_call.1} parent=11 // pred_fallthru
          _
        // Predicated region
        $region21: #{tpu_custom_call.1} parent=11 // pred_check
          %p432 = pneg %p170
        $region22: #{tpu_custom_call.1} parent=11 // pred_check_branch
          %434 = sbr.rel (%p432) target = $region24
        $region23: #{tpu_custom_call.1} parent=11 // pred_region
          _
        $region24: #{tpu_custom_call.1} parent=11 // pred_fallthru
          _
        // Predicated region
        $region25: #{tpu_custom_call.1} parent=11 // pred_check
          %p435 = pneg %p191
        $region26: #{tpu_custom_call.1} parent=11 // pred_check_branch
          %437 = sbr.rel (%p435) target = $region28
        $region27: #{tpu_custom_call.1} parent=11 // pred_region
          _
        $region28: #{tpu_custom_call.1} parent=11 // pred_fallthru
          _
        // Predicated region
        $region29: #{tpu_custom_call.1} parent=11 // pred_check
          %p438 = pneg %p212
        $region30: #{tpu_custom_call.1} parent=11 // pred_check_branch
          %440 = sbr.rel (%p438) target = $region32
        $region31: #{tpu_custom_call.1} parent=11 // pred_region
          _
        $region32: #{tpu_custom_call.1} parent=11 // pred_fallthru
          _
        // Predicated region
        $region33: #{tpu_custom_call.1} parent=11 // pred_check
          %p441 = pneg %p233
        $region34: #{tpu_custom_call.1} parent=11 // pred_check_branch
          %443 = sbr.rel (%p441) target = $region36
        $region35: #{tpu_custom_call.1} parent=11 // pred_region
          _
        $region36: #{tpu_custom_call.1} parent=11 // pred_fallthru
          _
        // Predicated region
        $region37: #{tpu_custom_call.1} parent=11 // pred_check
          %p444 = pneg %p254
        $region38: #{tpu_custom_call.1} parent=11 // pred_check_branch
          %446 = sbr.rel (%p444) target = $region40
        $region39: #{tpu_custom_call.1} parent=11 // pred_region
          _
        $region40: #{tpu_custom_call.1} parent=11 // pred_fallthru
          _
        // Predicated region
        $region41: #{tpu_custom_call.1} parent=11 // pred_check
          %p447 = pneg %p275
        $region42: #{tpu_custom_call.1} parent=11 // pred_check_branch
          %449 = sbr.rel (%p447) target = $region44
        $region43: #{tpu_custom_call.1} parent=11 // pred_region
          _
        $region44: #{tpu_custom_call.1} parent=11 // pred_fallthru
          _
        // Predicated region
        $region45: #{tpu_custom_call.1} parent=11 // pred_check
          %p450 = pneg %p296
        $region46: #{tpu_custom_call.1} parent=11 // pred_check_branch
          %452 = sbr.rel (%p450) target = $region48
        $region47: #{tpu_custom_call.1} parent=11 // pred_region
          _
        $region48: #{tpu_custom_call.1} parent=11 // pred_fallthru
          _
        // Predicated region
        $region49: #{tpu_custom_call.1} parent=11 // pred_check
          %p453 = pneg %p317
        $region50: #{tpu_custom_call.1} parent=11 // pred_check_branch
          %455 = sbr.rel (%p453) target = $region52
        $region51: #{tpu_custom_call.1} parent=11 // pred_region
          _
        $region52: #{tpu_custom_call.1} parent=11 // pred_fallthru
          _
        // Predicated region
        $region53: #{tpu_custom_call.1} parent=11 // pred_check
          %p456 = pneg %p338
        $region54: #{tpu_custom_call.1} parent=11 // pred_check_branch
          %458 = sbr.rel (%p456) target = $region56
        $region55: #{tpu_custom_call.1} parent=11 // pred_region
          _
        $region56: #{tpu_custom_call.1} parent=11 // pred_fallthru
          _
        // Predicated region
        $region57: #{tpu_custom_call.1} parent=11 // pred_check
          %p459 = pneg %p359
        $region58: #{tpu_custom_call.1} parent=11 // pred_check_branch
          %461 = sbr.rel (%p459) target = $region60
        $region59: #{tpu_custom_call.1} parent=11 // pred_region
          _
        $region60: #{tpu_custom_call.1} parent=11 // pred_fallthru
          _
      $region12: #{tpu_custom_call.1} parent=5 // pred_fallthru
        _
      %p462 = scmp.lt.s32.totalorder %s29, 2
      // Predicated region
      $region61: #{tpu_custom_call.1} parent=5 // pred_check
        %p463 = pneg %p462
      $region62: #{tpu_custom_call.1} parent=5 // pred_check_branch
        %465 = sbr.rel (%p463) target = $region64
      $region63: #{tpu_custom_call.1} parent=5 // pred_region
        // Predicated region
        $region65: #{tpu_custom_call.1} parent=63 // pred_check
          %p466 = pneg %p49
        $region66: #{tpu_custom_call.1} parent=63 // pred_check_branch
          %468 = sbr.rel (%p466) target = $region68
        $region67: #{tpu_custom_call.1} parent=63 // pred_region
          %p469 = scmp.lt.s32.totalorder %s29, 1
          %s470 = scalar_select %p469, %s29, 1
          %s471 = smul.addr %s470, 8
          %s472 = scalar_lea.vmem %s0, %s471
        $region68: #{tpu_custom_call.1} parent=63 // pred_fallthru
          _
        // Predicated region
        $region69: #{tpu_custom_call.1} parent=63 // pred_check
          %p473 = pneg %p75
        $region70: #{tpu_custom_call.1} parent=63 // pred_check_branch
          %475 = sbr.rel (%p473) target = $region72
        $region71: #{tpu_custom_call.1} parent=63 // pred_region
          %p476 = scmp.lt.s32.totalorder %s29, 1
          %s477 = scalar_select %p476, %s29, 1
          %s478 = smul.addr %s477, 8
          %s479 = scalar_lea.vmem %s1, %s478
        $region72: #{tpu_custom_call.1} parent=63 // pred_fallthru
          _
        // Predicated region
        $region73: #{tpu_custom_call.1} parent=63 // pred_check
          %p480 = pneg %p101
        $region74: #{tpu_custom_call.1} parent=63 // pred_check_branch
          %482 = sbr.rel (%p480) target = $region76
        $region75: #{tpu_custom_call.1} parent=63 // pred_region
          %p483 = scmp.lt.s32.totalorder %s29, 1
          %s484 = scalar_select %p483, %s29, 1
          %s485 = scalar_lea.vmem %s2, %s484
        $region76: #{tpu_custom_call.1} parent=63 // pred_fallthru
          _
      $region64: #{tpu_custom_call.1} parent=5 // pred_fallthru
        _
      %p486 = scmp.le.s32.totalorder 1, %s29
      %p487 = scmp.lt.s32.totalorder %s29, 3
      %p488 = pnand %p486, %p487
      %p489 = pneg %p488
      // Predicated region
      $region77: #{tpu_custom_call.1} parent=5 // pred_check
        _
      $region78: #{tpu_custom_call.1} parent=5 // pred_check_branch
        %491 = sbr.rel (%p488) target = $region80
      $region79: #{tpu_custom_call.1} parent=5 // pred_region
        %s492 = ssub.s32 %s29, 1
        %p493 = scmp.lt.s32.totalorder %s34, 1
        %s494 = scalar_select %p493, %s34, 1
        %s495 = smul.addr %s494, 8
        %s496 = scalar_lea.vmem %s0, %s495
        %p497 = pneg %p55
        %p498 = pneg %p52
        %p499 = scmp.lt.s32.totalorder %s34, 1
        %s500 = scalar_select %p499, %s34, 1
        %s501 = smul.addr %s500, 8
        %s502 = scalar_lea.vmem %s1, %s501
        %p503 = pneg %p81
        %p504 = pneg %p78
        %p505 = scmp.lt.s32.totalorder %s34, 1
        %s506 = scalar_select %p505, %s34, 1
        %s507 = scalar_lea.vmem %s2, %s506
        %p508 = pneg %p107
        %p509 = pneg %p104
        %p510 = pneg %p128
        %p511 = pneg %p125
        %p512 = pneg %p149
        %p513 = pneg %p146
        %p514 = pneg %p170
        %p515 = pneg %p167
        %p516 = pneg %p191
        %p517 = pneg %p188
        %p518 = pneg %p212
        %p519 = pneg %p209
        %p520 = pneg %p233
        %p521 = pneg %p230
        %p522 = pneg %p254
        %p523 = pneg %p251
        %p524 = pneg %p275
        %p525 = pneg %p272
        %p526 = pneg %p296
        %p527 = pneg %p293
        %p528 = pneg %p317
        %p529 = pneg %p314
        %p530 = pneg %p338
        %p531 = pneg %p335
        %p532 = pneg %p359
        %p533 = pneg %p356
        %p534 = pneg %p385
        %p535 = pneg %p382
        %s536 = sand.u32 %s372, 1
        %s537 = scalar_lea.sflag [#allocation3], %s536
        %s538 = sand.u32 %s372, 1
        %s539 = smul.addr %s538, 8
        %s540 = scalar_lea.vmem [#allocation2], %s539
        %p541 = pneg %p411
        %p542 = pneg %p408
        %s543 = sand.u32 %s398, 1
        %s544 = scalar_lea.sflag [#allocation5], %s543
        %s545 = sand.u32 %s398, 1
        %s546 = smul.addr %s545, 32
        %s547 = scalar_lea.vmem [#allocation4], %s546
        %p548 = scmp.lt.s32.totalorder %s34, 1
        %s549 = scalar_select %p548, %s34, 1
        %s550 = smul.addr %s549, 8
        %s551 = scalar_lea.vmem %s0, %s550
        %p552 = scmp.lt.s32.totalorder %s34, 1
        %s553 = scalar_select %p552, %s34, 1
        %s554 = smul.addr %s553, 8
        %s555 = scalar_lea.vmem %s1, %s554
        %p556 = scmp.lt.s32.totalorder %s34, 1
        %s557 = scalar_select %p556, %s34, 1
        %s558 = scalar_lea.vmem %s2, %s557
        %v559 = vld [vmem:[%s551] sm:$0xff]
        %v560 = vld [vmem:[%s3] sm:$0xff]
        %v561 = vld [vmem:[%s3 + $0x8] sm:$0xff]
        %v562 = vld [vmem:[%s3 + $0x10] sm:$0xff]
        %v563 = vld [vmem:[%s3 + $0x18] sm:$0xff]
        %v564 = vld [vmem:[%s4] sm:$0x1]
        %v566 = vlaneseq
        %v567 = vshrl.u32 %v566, 7
        %v568 = vsub.s32 0, %v567
        %v569 = vrot.slane %v564, %v568
        %vm571 = vcmask 261120
        %v573 = vsel %vm571, %v559, 0
        %575 = vmatprep.subr.mxu0 0.0
        %576 = vmatpush1.msra.mxu0 %v560
        %577 = vmatprep.subr.mxu0 0.0
        %578 = vmatpush1.msra.mxu0 %v561
        %579 = vmatprep.subr.mxu0 0.0
        %580 = vmatpush1.msra.mxu0 %v562
        %581 = vmatprep.subr.mxu0 0.0
        %582 = vmatpush1.msra.mxu0 %v563
        %583 = vmatprep.subr.mxu0 0.0
        %584 = vmatpush1.msra.mxu0 0.0
        %585 = vmatprep.subr.mxu0 0.0
        %586 = vmatpush1.msra.mxu0 0.0
        %587 = vmatprep.subr.mxu0 0.0
        %588 = vmatpush1.msra.mxu0 0.0
        %589 = vmatprep.subr.mxu0 0.0
        %590 = vmatpush1.msra.mxu0 0.0
        %591 = vmatprep.subr.mxu0 0.0
        %592 = vmatpush1.msra.mxu0 0.0
        %593 = vmatprep.subr.mxu0 0.0
        %594 = vmatpush1.msra.mxu0 0.0
        %595 = vmatprep.subr.mxu0 0.0
        %596 = vmatpush1.msra.mxu0 0.0
        %597 = vmatprep.subr.mxu0 0.0
        %598 = vmatpush1.msra.mxu0 0.0
        %599 = vmatprep.subr.mxu0 0.0
        %600 = vmatpush1.msra.mxu0 0.0
        %601 = vmatprep.subr.mxu0 0.0
        %602 = vmatpush1.msra.mxu0 0.0
        %603 = vmatprep.subr.mxu0 0.0
        %604 = vmatpush1.msra.mxu0 0.0
        %605 = vmatprep.subr.mxu0 0.0
        %606 = vmatpush1.msra.mxu0 0.0
        %607 = vmatprep.subr.mxu0 0.0
        %608 = vmatpush1.msra.mxu0 0.0
        %609 = vmatprep.subr.mxu0 0.0
        %610 = vmatpush1.msra.mxu0 0.0
        %611 = vmatprep.subr.mxu0 0.0
        %612 = vmatpush1.msra.mxu0 0.0
        %613 = vmatprep.subr.mxu0 0.0
        %614 = vmatpush1.msra.mxu0 0.0
        %615 = vmatprep.subr.mxu0 0.0
        %616 = vmatpush1.msra.mxu0 0.0
        %617 = vmatprep.subr.mxu0 0.0
        %618 = vmatpush1.msra.mxu0 0.0
        %619 = vmatprep.subr.mxu0 0.0
        %620 = vmatpush1.msra.mxu0 0.0
        %621 = vmatprep.subr.mxu0 0.0
        %622 = vmatpush1.msra.mxu0 0.0
        %623 = vmatprep.subr.mxu0 0.0
        %624 = vmatpush1.msra.mxu0 0.0
        %625 = vmatprep.subr.mxu0 0.0
        %626 = vmatpush1.msra.mxu0 0.0
        %627 = vmatprep.subr.mxu0 0.0
        %628 = vmatpush1.msra.mxu0 0.0
        %629 = vmatprep.subr.mxu0 0.0
        %630 = vmatpush1.msra.mxu0 0.0
        %631 = vmatprep.subr.mxu0 0.0
        %632 = vmatpush1.msra.mxu0 0.0
        %633 = vmatprep.subr.mxu0 0.0
        %634 = vmatpush1.msra.mxu0 0.0
        %635 = vmatprep.subr.mxu0 0.0
        %636 = vmatpush1.msra.mxu0 0.0
        %637 = vmatprep.subr.mxu0 0.0
        %638 = vmatpush1.msra.mxu0 0.0
        %639 = vmatprep.mubr.f32.mxu0 0.0
        %640 = vmatmul.mubr.f32.gmra.mrb[0].mxu0 %v573
        %v641 = vpop.f32.mrb[0].mxu0
        %v642 = vadd.f32 %v569, %v641
        %v643 = vpop.f32.mrb[0].mxu0
        %644 = vdwg.mxu0
        %v645 = vld [vmem:[%s558] sm:$0x1]
        %vm646 = vcmp.gt.f32.partialorder %v645, 0.0
        %v647 = vsel %vm646, 0.0, -1e+30
        %649 = vrot.lane.b32.xlu0 %v642, 96
        %v650 = vpop.permute.xlu0 %649
        %vm651 = vcmask 64512
        %v652 = vsel %vm651, %v642, 0
        %v654 = vsel %vm651, %v650, 0
        %656 = vmatprep.subr.mxu0 0.0
        %657 = vmatpush1.xpose.msra.mxu0 %v654
        %658 = vmatprep.subr.mxu0 0.0
        %659 = vmatpush1.xpose.msra.mxu0 0.0
        %660 = vmatprep.subr.mxu0 0.0
        %661 = vmatpush1.xpose.msra.mxu0 0.0
        %662 = vmatprep.subr.mxu0 0.0
        %663 = vmatpush1.xpose.msra.mxu0 0.0
        %664 = vmatprep.subr.mxu0 0.0
        %665 = vmatpush1.xpose.msra.mxu0 0.0
        %666 = vmatprep.subr.mxu0 0.0
        %667 = vmatpush1.xpose.msra.mxu0 0.0
        %668 = vmatprep.subr.mxu0 0.0
        %669 = vmatpush1.xpose.msra.mxu0 0.0
        %670 = vmatprep.subr.mxu0 0.0
        %671 = vmatpush1.xpose.msra.mxu0 0.0
        %672 = vmatprep.subr.mxu0 0.0
        %673 = vmatpush1.xpose.msra.mxu0 0.0
        %674 = vmatprep.subr.mxu0 0.0
        %675 = vmatpush1.xpose.msra.mxu0 0.0
        %676 = vmatprep.subr.mxu0 0.0
        %677 = vmatpush1.xpose.msra.mxu0 0.0
        %678 = vmatprep.subr.mxu0 0.0
        %679 = vmatpush1.xpose.msra.mxu0 0.0
        %680 = vmatprep.subr.mxu0 0.0
        %681 = vmatpush1.xpose.msra.mxu0 0.0
        %682 = vmatprep.subr.mxu0 0.0
        %683 = vmatpush1.xpose.msra.mxu0 0.0
        %684 = vmatprep.subr.mxu0 0.0
        %685 = vmatpush1.xpose.msra.mxu0 0.0
        %686 = vmatprep.subr.mxu0 0.0
        %687 = vmatpush1.xpose.msra.mxu0 0.0
        %688 = vmatprep.subr.mxu0 0.0
        %689 = vmatpush1.xpose.msra.mxu0 0.0
        %690 = vmatprep.subr.mxu0 0.0
        %691 = vmatpush1.xpose.msra.mxu0 0.0
        %692 = vmatprep.subr.mxu0 0.0
        %693 = vmatpush1.xpose.msra.mxu0 0.0
        %694 = vmatprep.subr.mxu0 0.0
        %695 = vmatpush1.xpose.msra.mxu0 0.0
        %696 = vmatprep.subr.mxu0 0.0
        %697 = vmatpush1.xpose.msra.mxu0 0.0
        %698 = vmatprep.subr.mxu0 0.0
        %699 = vmatpush1.xpose.msra.mxu0 0.0
        %700 = vmatprep.subr.mxu0 0.0
        %701 = vmatpush1.xpose.msra.mxu0 0.0
        %702 = vmatprep.subr.mxu0 0.0
        %703 = vmatpush1.xpose.msra.mxu0 0.0
        %704 = vmatprep.subr.mxu0 0.0
        %705 = vmatpush1.xpose.msra.mxu0 0.0
        %706 = vmatprep.subr.mxu0 0.0
        %707 = vmatpush1.xpose.msra.mxu0 0.0
        %708 = vmatprep.subr.mxu0 0.0
        %709 = vmatpush1.xpose.msra.mxu0 0.0
        %710 = vmatprep.subr.mxu0 0.0
        %711 = vmatpush1.xpose.msra.mxu0 0.0
        %712 = vmatprep.subr.mxu0 0.0
        %713 = vmatpush1.xpose.msra.mxu0 0.0
        %714 = vmatprep.subr.mxu0 0.0
        %715 = vmatpush1.xpose.msra.mxu0 0.0
        %716 = vmatprep.subr.mxu0 0.0
        %717 = vmatpush1.xpose.msra.mxu0 0.0
        %718 = vmatprep.subr.mxu0 0.0
        %719 = vmatpush1.xpose.msra.mxu0 0.0
        %720 = vmatprep.mubr.f32.mxu0 0.0
        %721 = vmatmul.mubr.f32.gmra.mrb[0].mxu0 %v652
        %v722 = vpop.f32.mrb[0].mxu0
        %v723 = vadd.f32 0.0, %v722
        %v724 = vpop.f32.mrb[0].mxu0
        %725 = vdwg.mxu0
        %v726 = vmul.f32 %v723, 0.35355338
        %v728 = vlaneseq
        %v729 = vshrl.u32 %v728, 7
        %v730 = vsub.s32 0, %v729
        %v731 = vrot.slane %v647, %v730
        %v733 = vadd.f32 %v726, %v731
        %v734 = vsel %vm651, %v733, -inf
        %735 = vmax.xlane.f32.xlu0 %v734
        %v736 = vpop.xlane.xlu0 %735
        %v737 = vsub.f32 %v733, %v736
        %v738 = vmul.f32 %v737, 1.442695
        %v739 = vpow.pop %v738
        %v740 = vsel %vm651, %v739, 0.0
        %741 = vadd.xlane.f32.xlu0 %v740
        %v742 = vpop.xlane.xlu0 %741
        %v743 = vrcp.pop %v742
        %v744 = vmul.f32 %v739, %v743
        %745 = vst.msk [vmem:[%s547] sm:$0xff] %vm651, %v744
        %746 = vrot.lane.b32.xlu0 %v642, 64
        %v747 = vpop.permute.xlu0 %746
        %v750 = vsel %vm651, %v744, 0
        %752 = vmatprep.subr.mxu0 0.0
        %753 = vmatpush1.msra.mxu0 %v747
        %754 = vmatprep.subr.mxu0 0.0
        %755 = vmatpush1.msra.mxu0 0.0
        %756 = vmatprep.subr.mxu0 0.0
        %757 = vmatpush1.msra.mxu0 0.0
        %758 = vmatprep.subr.mxu0 0.0
        %759 = vmatpush1.msra.mxu0 0.0
        %760 = vmatprep.subr.mxu0 0.0
        %761 = vmatpush1.msra.mxu0 0.0
        %762 = vmatprep.subr.mxu0 0.0
        %763 = vmatpush1.msra.mxu0 0.0
        %764 = vmatprep.subr.mxu0 0.0
        %765 = vmatpush1.msra.mxu0 0.0
        %766 = vmatprep.subr.mxu0 0.0
        %767 = vmatpush1.msra.mxu0 0.0
        %768 = vmatprep.subr.mxu0 0.0
        %769 = vmatpush1.msra.mxu0 0.0
        %770 = vmatprep.subr.mxu0 0.0
        %771 = vmatpush1.msra.mxu0 0.0
        %772 = vmatprep.subr.mxu0 0.0
        %773 = vmatpush1.msra.mxu0 0.0
        %774 = vmatprep.subr.mxu0 0.0
        %775 = vmatpush1.msra.mxu0 0.0
        %776 = vmatprep.subr.mxu0 0.0
        %777 = vmatpush1.msra.mxu0 0.0
        %778 = vmatprep.subr.mxu0 0.0
        %779 = vmatpush1.msra.mxu0 0.0
        %780 = vmatprep.subr.mxu0 0.0
        %781 = vmatpush1.msra.mxu0 0.0
        %782 = vmatprep.subr.mxu0 0.0
        %783 = vmatpush1.msra.mxu0 0.0
        %784 = vmatprep.subr.mxu0 0.0
        %785 = vmatpush1.msra.mxu0 0.0
        %786 = vmatprep.subr.mxu0 0.0
        %787 = vmatpush1.msra.mxu0 0.0
        %788 = vmatprep.subr.mxu0 0.0
        %789 = vmatpush1.msra.mxu0 0.0
        %790 = vmatprep.subr.mxu0 0.0
        %791 = vmatpush1.msra.mxu0 0.0
        %792 = vmatprep.subr.mxu0 0.0
        %793 = vmatpush1.msra.mxu0 0.0
        %794 = vmatprep.subr.mxu0 0.0
        %795 = vmatpush1.msra.mxu0 0.0
        %796 = vmatprep.subr.mxu0 0.0
        %797 = vmatpush1.msra.mxu0 0.0
        %798 = vmatprep.subr.mxu0 0.0
        %799 = vmatpush1.msra.mxu0 0.0
        %800 = vmatprep.subr.mxu0 0.0
        %801 = vmatpush1.msra.mxu0 0.0
        %802 = vmatprep.subr.mxu0 0.0
        %803 = vmatpush1.msra.mxu0 0.0
        %804 = vmatprep.subr.mxu0 0.0
        %805 = vmatpush1.msra.mxu0 0.0
        %806 = vmatprep.subr.mxu0 0.0
        %807 = vmatpush1.msra.mxu0 0.0
        %808 = vmatprep.subr.mxu0 0.0
        %809 = vmatpush1.msra.mxu0 0.0
        %810 = vmatprep.subr.mxu0 0.0
        %811 = vmatpush1.msra.mxu0 0.0
        %812 = vmatprep.subr.mxu0 0.0
        %813 = vmatpush1.msra.mxu0 0.0
        %814 = vmatprep.subr.mxu0 0.0
        %815 = vmatpush1.msra.mxu0 0.0
        %816 = vmatprep.mubr.f32.mxu0 0.0
        %817 = vmatmul.mubr.f32.gmra.mrb[0].mxu0 %v750
        %v818 = vpop.f32.mrb[0].mxu0
        %v819 = vadd.f32 0.0, %v818
        %v820 = vpop.f32.mrb[0].mxu0
        %821 = vdwg.mxu0
        %v822 = vld [vmem:[%s5] sm:$0xff]
        %823 = vrot.lane.b32.xlu0 %v642, 120
        %v824 = vpop.permute.xlu0 %823
        %825 = vrot.lane.b32.xlu0 %v642, 88
        %v826 = vpop.permute.xlu0 %825
        %v827 = vsel %vm651, %v824, 0
        %v829 = vsel %vm651, %v826, 0
        %831 = vmatprep.subr.mxu0 0.0
        %832 = vmatpush1.xpose.msra.mxu0 %v829
        %833 = vmatprep.subr.mxu0 0.0
        %834 = vmatpush1.xpose.msra.mxu0 0.0
        %835 = vmatprep.subr.mxu0 0.0
        %836 = vmatpush1.xpose.msra.mxu0 0.0
        %837 = vmatprep.subr.mxu0 0.0
        %838 = vmatpush1.xpose.msra.mxu0 0.0
        %839 = vmatprep.subr.mxu0 0.0
        %840 = vmatpush1.xpose.msra.mxu0 0.0
        %841 = vmatprep.subr.mxu0 0.0
        %842 = vmatpush1.xpose.msra.mxu0 0.0
        %843 = vmatprep.subr.mxu0 0.0
        %844 = vmatpush1.xpose.msra.mxu0 0.0
        %845 = vmatprep.subr.mxu0 0.0
        %846 = vmatpush1.xpose.msra.mxu0 0.0
        %847 = vmatprep.subr.mxu0 0.0
        %848 = vmatpush1.xpose.msra.mxu0 0.0
        %849 = vmatprep.subr.mxu0 0.0
        %850 = vmatpush1.xpose.msra.mxu0 0.0
        %851 = vmatprep.subr.mxu0 0.0
        %852 = vmatpush1.xpose.msra.mxu0 0.0
        %853 = vmatprep.subr.mxu0 0.0
        %854 = vmatpush1.xpose.msra.mxu0 0.0
        %855 = vmatprep.subr.mxu0 0.0
        %856 = vmatpush1.xpose.msra.mxu0 0.0
        %857 = vmatprep.subr.mxu0 0.0
        %858 = vmatpush1.xpose.msra.mxu0 0.0
        %859 = vmatprep.subr.mxu0 0.0
        %860 = vmatpush1.xpose.msra.mxu0 0.0
        %861 = vmatprep.subr.mxu0 0.0
        %862 = vmatpush1.xpose.msra.mxu0 0.0
        %863 = vmatprep.subr.mxu0 0.0
        %864 = vmatpush1.xpose.msra.mxu0 0.0
        %865 = vmatprep.subr.mxu0 0.0
        %866 = vmatpush1.xpose.msra.mxu0 0.0
        %867 = vmatprep.subr.mxu0 0.0
        %868 = vmatpush1.xpose.msra.mxu0 0.0
        %869 = vmatprep.subr.mxu0 0.0
        %870 = vmatpush1.xpose.msra.mxu0 0.0
        %871 = vmatprep.subr.mxu0 0.0
        %872 = vmatpush1.xpose.msra.mxu0 0.0
        %873 = vmatprep.subr.mxu0 0.0
        %874 = vmatpush1.xpose.msra.mxu0 0.0
        %875 = vmatprep.subr.mxu0 0.0
        %876 = vmatpush1.xpose.msra.mxu0 0.0
        %877 = vmatprep.subr.mxu0 0.0
        %878 = vmatpush1.xpose.msra.mxu0 0.0
        %879 = vmatprep.subr.mxu0 0.0
        %880 = vmatpush1.xpose.msra.mxu0 0.0
        %881 = vmatprep.subr.mxu0 0.0
        %882 = vmatpush1.xpose.msra.mxu0 0.0
        %883 = vmatprep.subr.mxu0 0.0
        %884 = vmatpush1.xpose.msra.mxu0 0.0
        %885 = vmatprep.subr.mxu0 0.0
        %886 = vmatpush1.xpose.msra.mxu0 0.0
        %887 = vmatprep.subr.mxu0 0.0
        %888 = vmatpush1.xpose.msra.mxu0 0.0
        %889 = vmatprep.subr.mxu0 0.0
        %890 = vmatpush1.xpose.msra.mxu0 0.0
        %891 = vmatprep.subr.mxu0 0.0
        %892 = vmatpush1.xpose.msra.mxu0 0.0
        %893 = vmatprep.subr.mxu0 0.0
        %894 = vmatpush1.xpose.msra.mxu0 0.0
        %895 = vmatprep.mubr.f32.mxu0 0.0
        %896 = vmatmul.mubr.f32.gmra.mrb[0].mxu0 %v827
        %v897 = vpop.f32.mrb[0].mxu0
        %v898 = vadd.f32 0.0, %v897
        %v899 = vpop.f32.mrb[0].mxu0
        %900 = vdwg.mxu0
        %v901 = vmul.f32 %v898, 0.35355338
        %v902 = vadd.f32 %v901, %v731
        %v903 = vsel %vm651, %v902, -inf
        %904 = vmax.xlane.f32.xlu0 %v903
        %v905 = vpop.xlane.xlu0 %904
        %v906 = vsub.f32 %v902, %v905
        %v907 = vmul.f32 %v906, 1.442695
        %v908 = vpow.pop %v907
        %v909 = vsel %vm651, %v908, 0.0
        %910 = vadd.xlane.f32.xlu0 %v909
        %v911 = vpop.xlane.xlu0 %910
        %v912 = vrcp.pop %v911
        %v913 = vmul.f32 %v908, %v912
        %s914 = scalar_lea.vmem %s547, 8 [#allocation4]
        %915 = vst.msk [vmem:[%s914] sm:$0xff] %vm651, %v913
        %916 = vrot.lane.b32.xlu0 %v642, 56
        %v917 = vpop.permute.xlu0 %916
        %v920 = vsel %vm651, %v913, 0
        %922 = vmatprep.subr.mxu0 0.0
        %923 = vmatpush1.msra.mxu0 %v917
        %924 = vmatprep.subr.mxu0 0.0
        %925 = vmatpush1.msra.mxu0 0.0
        %926 = vmatprep.subr.mxu0 0.0
        %927 = vmatpush1.msra.mxu0 0.0
        %928 = vmatprep.subr.mxu0 0.0
        %929 = vmatpush1.msra.mxu0 0.0
        %930 = vmatprep.subr.mxu0 0.0
        %931 = vmatpush1.msra.mxu0 0.0
        %932 = vmatprep.subr.mxu0 0.0
        %933 = vmatpush1.msra.mxu0 0.0
        %934 = vmatprep.subr.mxu0 0.0
        %935 = vmatpush1.msra.mxu0 0.0
        %936 = vmatprep.subr.mxu0 0.0
        %937 = vmatpush1.msra.mxu0 0.0
        %938 = vmatprep.subr.mxu0 0.0
        %939 = vmatpush1.msra.mxu0 0.0
        %940 = vmatprep.subr.mxu0 0.0
        %941 = vmatpush1.msra.mxu0 0.0
        %942 = vmatprep.subr.mxu0 0.0
        %943 = vmatpush1.msra.mxu0 0.0
        %944 = vmatprep.subr.mxu0 0.0
        %945 = vmatpush1.msra.mxu0 0.0
        %946 = vmatprep.subr.mxu0 0.0
        %947 = vmatpush1.msra.mxu0 0.0
        %948 = vmatprep.subr.mxu0 0.0
        %949 = vmatpush1.msra.mxu0 0.0
        %950 = vmatprep.subr.mxu0 0.0
        %951 = vmatpush1.msra.mxu0 0.0
        %952 = vmatprep.subr.mxu0 0.0
        %953 = vmatpush1.msra.mxu0 0.0
        %954 = vmatprep.subr.mxu0 0.0
        %955 = vmatpush1.msra.mxu0 0.0
        %956 = vmatprep.subr.mxu0 0.0
        %957 = vmatpush1.msra.mxu0 0.0
        %958 = vmatprep.subr.mxu0 0.0
        %959 = vmatpush1.msra.mxu0 0.0
        %960 = vmatprep.subr.mxu0 0.0
        %961 = vmatpush1.msra.mxu0 0.0
        %962 = vmatprep.subr.mxu0 0.0
        %963 = vmatpush1.msra.mxu0 0.0
        %964 = vmatprep.subr.mxu0 0.0
        %965 = vmatpush1.msra.mxu0 0.0
        %966 = vmatprep.subr.mxu0 0.0
        %967 = vmatpush1.msra.mxu0 0.0
        %968 = vmatprep.subr.mxu0 0.0
        %969 = vmatpush1.msra.mxu0 0.0
        %970 = vmatprep.subr.mxu0 0.0
        %971 = vmatpush1.msra.mxu0 0.0
        %972 = vmatprep.subr.mxu0 0.0
        %973 = vmatpush1.msra.mxu0 0.0
        %974 = vmatprep.subr.mxu0 0.0
        %975 = vmatpush1.msra.mxu0 0.0
        %976 = vmatprep.subr.mxu0 0.0
        %977 = vmatpush1.msra.mxu0 0.0
        %978 = vmatprep.subr.mxu0 0.0
        %979 = vmatpush1.msra.mxu0 0.0
        %980 = vmatprep.subr.mxu0 0.0
        %981 = vmatpush1.msra.mxu0 0.0
        %982 = vmatprep.subr.mxu0 0.0
        %983 = vmatpush1.msra.mxu0 0.0
        %984 = vmatprep.subr.mxu0 0.0
        %985 = vmatpush1.msra.mxu0 0.0
        %986 = vmatprep.mubr.f32.mxu0 0.0
        %987 = vmatmul.mubr.f32.gmra.mrb[0].mxu0 %v920
        %v988 = vpop.f32.mrb[0].mxu0
        %v989 = vadd.f32 0.0, %v988
        %v990 = vpop.f32.mrb[0].mxu0
        %991 = vdwg.mxu0
        %s992 = scalar_lea.vmem %s5, 8
        %v993 = vld [vmem:[%s992] sm:$0xff]
        %v995 = vsel %vm651, %v989, 0
        %997 = vmatprep.subr.mxu0 0.0
        %998 = vmatpush1.msra.mxu0 %v993
        %999 = vmatprep.subr.mxu0 0.0
        %1000 = vmatpush1.msra.mxu0 0.0
        %1001 = vmatprep.subr.mxu0 0.0
        %1002 = vmatpush1.msra.mxu0 0.0
        %1003 = vmatprep.subr.mxu0 0.0
        %1004 = vmatpush1.msra.mxu0 0.0
        %1005 = vmatprep.subr.mxu0 0.0
        %1006 = vmatpush1.msra.mxu0 0.0
        %1007 = vmatprep.subr.mxu0 0.0
        %1008 = vmatpush1.msra.mxu0 0.0
        %1009 = vmatprep.subr.mxu0 0.0
        %1010 = vmatpush1.msra.mxu0 0.0
        %1011 = vmatprep.subr.mxu0 0.0
        %1012 = vmatpush1.msra.mxu0 0.0
        %1013 = vmatprep.subr.mxu0 0.0
        %1014 = vmatpush1.msra.mxu0 0.0
        %1015 = vmatprep.subr.mxu0 0.0
        %1016 = vmatpush1.msra.mxu0 0.0
        %1017 = vmatprep.subr.mxu0 0.0
        %1018 = vmatpush1.msra.mxu0 0.0
        %1019 = vmatprep.subr.mxu0 0.0
        %1020 = vmatpush1.msra.mxu0 0.0
        %1021 = vmatprep.subr.mxu0 0.0
        %1022 = vmatpush1.msra.mxu0 0.0
        %1023 = vmatprep.subr.mxu0 0.0
        %1024 = vmatpush1.msra.mxu0 0.0
        %1025 = vmatprep.subr.mxu0 0.0
        %1026 = vmatpush1.msra.mxu0 0.0
        %1027 = vmatprep.subr.mxu0 0.0
        %1028 = vmatpush1.msra.mxu0 0.0
        %1029 = vmatprep.subr.mxu0 0.0
        %1030 = vmatpush1.msra.mxu0 0.0
        %1031 = vmatprep.subr.mxu0 0.0
        %1032 = vmatpush1.msra.mxu0 0.0
        %1033 = vmatprep.subr.mxu0 0.0
        %1034 = vmatpush1.msra.mxu0 0.0
        %1035 = vmatprep.subr.mxu0 0.0
        %1036 = vmatpush1.msra.mxu0 0.0
        %1037 = vmatprep.subr.mxu0 0.0
        %1038 = vmatpush1.msra.mxu0 0.0
        %1039 = vmatprep.subr.mxu0 0.0
        %1040 = vmatpush1.msra.mxu0 0.0
        %1041 = vmatprep.subr.mxu0 0.0
        %1042 = vmatpush1.msra.mxu0 0.0
        %1043 = vmatprep.subr.mxu0 0.0
        %1044 = vmatpush1.msra.mxu0 0.0
        %1045 = vmatprep.subr.mxu0 0.0
        %1046 = vmatpush1.msra.mxu0 0.0
        %1047 = vmatprep.subr.mxu0 0.0
        %1048 = vmatpush1.msra.mxu0 0.0
        %1049 = vmatprep.subr.mxu0 0.0
        %1050 = vmatpush1.msra.mxu0 0.0
        %1051 = vmatprep.subr.mxu0 0.0
        %1052 = vmatpush1.msra.mxu0 0.0
        %1053 = vmatprep.subr.mxu0 0.0
        %1054 = vmatpush1.msra.mxu0 0.0
        %1055 = vmatprep.subr.mxu0 0.0
        %1056 = vmatpush1.msra.mxu0 0.0
        %1057 = vmatprep.subr.mxu0 0.0
        %1058 = vmatpush1.msra.mxu0 0.0
        %1059 = vmatprep.subr.mxu0 0.0
        %1060 = vmatpush1.msra.mxu0 0.0
        %1061 = vmatprep.mubr.f32.mxu0 0.0
        %1062 = vmatmul.mubr.f32.gmra.mrb[0].mxu0 %v995
        %v1063 = vpop.f32.mrb[0].mxu0
        %v1064 = vadd.f32 0.0, %v1063
        %v1065 = vpop.f32.mrb[0].mxu0
        %1066 = vdwg.mxu0
        %v1068 = vsel %vm651, %v819, 0
        %1070 = vmatprep.subr.mxu0 0.0
        %1071 = vmatpush1.msra.mxu0 %v822
        %1072 = vmatprep.subr.mxu0 0.0
        %1073 = vmatpush1.msra.mxu0 0.0
        %1074 = vmatprep.subr.mxu0 0.0
        %1075 = vmatpush1.msra.mxu0 0.0
        %1076 = vmatprep.subr.mxu0 0.0
        %1077 = vmatpush1.msra.mxu0 0.0
        %1078 = vmatprep.subr.mxu0 0.0
        %1079 = vmatpush1.msra.mxu0 0.0
        %1080 = vmatprep.subr.mxu0 0.0
        %1081 = vmatpush1.msra.mxu0 0.0
        %1082 = vmatprep.subr.mxu0 0.0
        %1083 = vmatpush1.msra.mxu0 0.0
        %1084 = vmatprep.subr.mxu0 0.0
        %1085 = vmatpush1.msra.mxu0 0.0
        %1086 = vmatprep.subr.mxu0 0.0
        %1087 = vmatpush1.msra.mxu0 0.0
        %1088 = vmatprep.subr.mxu0 0.0
        %1089 = vmatpush1.msra.mxu0 0.0
        %1090 = vmatprep.subr.mxu0 0.0
        %1091 = vmatpush1.msra.mxu0 0.0
        %1092 = vmatprep.subr.mxu0 0.0
        %1093 = vmatpush1.msra.mxu0 0.0
        %1094 = vmatprep.subr.mxu0 0.0
        %1095 = vmatpush1.msra.mxu0 0.0
        %1096 = vmatprep.subr.mxu0 0.0
        %1097 = vmatpush1.msra.mxu0 0.0
        %1098 = vmatprep.subr.mxu0 0.0
        %1099 = vmatpush1.msra.mxu0 0.0
        %1100 = vmatprep.subr.mxu0 0.0
        %1101 = vmatpush1.msra.mxu0 0.0
        %1102 = vmatprep.subr.mxu0 0.0
        %1103 = vmatpush1.msra.mxu0 0.0
        %1104 = vmatprep.subr.mxu0 0.0
        %1105 = vmatpush1.msra.mxu0 0.0
        %1106 = vmatprep.subr.mxu0 0.0
        %1107 = vmatpush1.msra.mxu0 0.0
        %1108 = vmatprep.subr.mxu0 0.0
        %1109 = vmatpush1.msra.mxu0 0.0
        %1110 = vmatprep.subr.mxu0 0.0
        %1111 = vmatpush1.msra.mxu0 0.0
        %1112 = vmatprep.subr.mxu0 0.0
        %1113 = vmatpush1.msra.mxu0 0.0
        %1114 = vmatprep.subr.mxu0 0.0
        %1115 = vmatpush1.msra.mxu0 0.0
        %1116 = vmatprep.subr.mxu0 0.0
        %1117 = vmatpush1.msra.mxu0 0.0
        %1118 = vmatprep.subr.mxu0 0.0
        %1119 = vmatpush1.msra.mxu0 0.0
        %1120 = vmatprep.subr.mxu0 0.0
        %1121 = vmatpush1.msra.mxu0 0.0
        %1122 = vmatprep.subr.mxu0 0.0
        %1123 = vmatpush1.msra.mxu0 0.0
        %1124 = vmatprep.subr.mxu0 0.0
        %1125 = vmatpush1.msra.mxu0 0.0
        %1126 = vmatprep.subr.mxu0 0.0
        %1127 = vmatpush1.msra.mxu0 0.0
        %1128 = vmatprep.subr.mxu0 0.0
        %1129 = vmatpush1.msra.mxu0 0.0
        %1130 = vmatprep.subr.mxu0 0.0
        %1131 = vmatpush1.msra.mxu0 0.0
        %1132 = vmatprep.subr.mxu0 0.0
        %1133 = vmatpush1.msra.mxu0 0.0
        %1134 = vmatprep.mubr.f32.mxu0 0.0
        %1135 = vmatmul.mubr.f32.gmra.mrb[0].mxu0 %v1068
        %v1136 = vpop.f32.mrb[0].mxu0
        %v1137 = vadd.f32 %v1064, %v1136
        %v1138 = vpop.f32.mrb[0].mxu0
        %1139 = vdwg.mxu0
        %1140 = vrot.lane.b32.xlu0 %v642, 112
        %v1141 = vpop.permute.xlu0 %1140
        %1142 = vrot.lane.b32.xlu0 %v642, 80
        %v1143 = vpop.permute.xlu0 %1142
        %v1144 = vsel %vm651, %v1141, 0
        %v1146 = vsel %vm651, %v1143, 0
        %1148 = vmatprep.subr.mxu0 0.0
        %1149 = vmatpush1.xpose.msra.mxu0 %v1146
        %1150 = vmatprep.subr.mxu0 0.0
        %1151 = vmatpush1.xpose.msra.mxu0 0.0
        %1152 = vmatprep.subr.mxu0 0.0
        %1153 = vmatpush1.xpose.msra.mxu0 0.0
        %1154 = vmatprep.subr.mxu0 0.0
        %1155 = vmatpush1.xpose.msra.mxu0 0.0
        %1156 = vmatprep.subr.mxu0 0.0
        %1157 = vmatpush1.xpose.msra.mxu0 0.0
        %1158 = vmatprep.subr.mxu0 0.0
        %1159 = vmatpush1.xpose.msra.mxu0 0.0
        %1160 = vmatprep.subr.mxu0 0.0
        %1161 = vmatpush1.xpose.msra.mxu0 0.0
        %1162 = vmatprep.subr.mxu0 0.0
        %1163 = vmatpush1.xpose.msra.mxu0 0.0
        %1164 = vmatprep.subr.mxu0 0.0
        %1165 = vmatpush1.xpose.msra.mxu0 0.0
        %1166 = vmatprep.subr.mxu0 0.0
        %1167 = vmatpush1.xpose.msra.mxu0 0.0
        %1168 = vmatprep.subr.mxu0 0.0
        %1169 = vmatpush1.xpose.msra.mxu0 0.0
        %1170 = vmatprep.subr.mxu0 0.0
        %1171 = vmatpush1.xpose.msra.mxu0 0.0
        %1172 = vmatprep.subr.mxu0 0.0
        %1173 = vmatpush1.xpose.msra.mxu0 0.0
        %1174 = vmatprep.subr.mxu0 0.0
        %1175 = vmatpush1.xpose.msra.mxu0 0.0
        %1176 = vmatprep.subr.mxu0 0.0
        %1177 = vmatpush1.xpose.msra.mxu0 0.0
        %1178 = vmatprep.subr.mxu0 0.0
        %1179 = vmatpush1.xpose.msra.mxu0 0.0
        %1180 = vmatprep.subr.mxu0 0.0
        %1181 = vmatpush1.xpose.msra.mxu0 0.0
        %1182 = vmatprep.subr.mxu0 0.0
        %1183 = vmatpush1.xpose.msra.mxu0 0.0
        %1184 = vmatprep.subr.mxu0 0.0
        %1185 = vmatpush1.xpose.msra.mxu0 0.0
        %1186 = vmatprep.subr.mxu0 0.0
        %1187 = vmatpush1.xpose.msra.mxu0 0.0
        %1188 = vmatprep.subr.mxu0 0.0
        %1189 = vmatpush1.xpose.msra.mxu0 0.0
        %1190 = vmatprep.subr.mxu0 0.0
        %1191 = vmatpush1.xpose.msra.mxu0 0.0
        %1192 = vmatprep.subr.mxu0 0.0
        %1193 = vmatpush1.xpose.msra.mxu0 0.0
        %1194 = vmatprep.subr.mxu0 0.0
        %1195 = vmatpush1.xpose.msra.mxu0 0.0
        %1196 = vmatprep.subr.mxu0 0.0
        %1197 = vmatpush1.xpose.msra.mxu0 0.0
        %1198 = vmatprep.subr.mxu0 0.0
        %1199 = vmatpush1.xpose.msra.mxu0 0.0
        %1200 = vmatprep.subr.mxu0 0.0
        %1201 = vmatpush1.xpose.msra.mxu0 0.0
        %1202 = vmatprep.subr.mxu0 0.0
        %1203 = vmatpush1.xpose.msra.mxu0 0.0
        %1204 = vmatprep.subr.mxu0 0.0
        %1205 = vmatpush1.xpose.msra.mxu0 0.0
        %1206 = vmatprep.subr.mxu0 0.0
        %1207 = vmatpush1.xpose.msra.mxu0 0.0
        %1208 = vmatprep.subr.mxu0 0.0
        %1209 = vmatpush1.xpose.msra.mxu0 0.0
        %1210 = vmatprep.subr.mxu0 0.0
        %1211 = vmatpush1.xpose.msra.mxu0 0.0
        %1212 = vmatprep.mubr.f32.mxu0 0.0
        %1213 = vmatmul.mubr.f32.gmra.mrb[0].mxu0 %v1144
        %v1214 = vpop.f32.mrb[0].mxu0
        %v1215 = vadd.f32 0.0, %v1214
        %v1216 = vpop.f32.mrb[0].mxu0
        %1217 = vdwg.mxu0
        %v1218 = vmul.f32 %v1215, 0.35355338
        %v1219 = vadd.f32 %v1218, %v731
        %v1220 = vsel %vm651, %v1219, -inf
        %1221 = vmax.xlane.f32.xlu0 %v1220
        %v1222 = vpop.xlane.xlu0 %1221
        %v1223 = vsub.f32 %v1219, %v1222
        %v1224 = vmul.f32 %v1223, 1.442695
        %v1225 = vpow.pop %v1224
        %v1226 = vsel %vm651, %v1225, 0.0
        %1227 = vadd.xlane.f32.xlu0 %v1226
        %v1228 = vpop.xlane.xlu0 %1227
        %v1229 = vrcp.pop %v1228
        %v1230 = vmul.f32 %v1225, %v1229
        %s1231 = scalar_lea.vmem %s547, 16 [#allocation4]
        %1232 = vst.msk [vmem:[%s1231] sm:$0xff] %vm651, %v1230
        %1233 = vrot.lane.b32.xlu0 %v642, 48
        %v1234 = vpop.permute.xlu0 %1233
        %v1237 = vsel %vm651, %v1230, 0
        %1239 = vmatprep.subr.mxu0 0.0
        %1240 = vmatpush1.msra.mxu0 %v1234
        %1241 = vmatprep.subr.mxu0 0.0
        %1242 = vmatpush1.msra.mxu0 0.0
        %1243 = vmatprep.subr.mxu0 0.0
        %1244 = vmatpush1.msra.mxu0 0.0
        %1245 = vmatprep.subr.mxu0 0.0
        %1246 = vmatpush1.msra.mxu0 0.0
        %1247 = vmatprep.subr.mxu0 0.0
        %1248 = vmatpush1.msra.mxu0 0.0
        %1249 = vmatprep.subr.mxu0 0.0
        %1250 = vmatpush1.msra.mxu0 0.0
        %1251 = vmatprep.subr.mxu0 0.0
        %1252 = vmatpush1.msra.mxu0 0.0
        %1253 = vmatprep.subr.mxu0 0.0
        %1254 = vmatpush1.msra.mxu0 0.0
        %1255 = vmatprep.subr.mxu0 0.0
        %1256 = vmatpush1.msra.mxu0 0.0
        %1257 = vmatprep.subr.mxu0 0.0
        %1258 = vmatpush1.msra.mxu0 0.0
        %1259 = vmatprep.subr.mxu0 0.0
        %1260 = vmatpush1.msra.mxu0 0.0
        %1261 = vmatprep.subr.mxu0 0.0
        %1262 = vmatpush1.msra.mxu0 0.0
        %1263 = vmatprep.subr.mxu0 0.0
        %1264 = vmatpush1.msra.mxu0 0.0
        %1265 = vmatprep.subr.mxu0 0.0
        %1266 = vmatpush1.msra.mxu0 0.0
        %1267 = vmatprep.subr.mxu0 0.0
        %1268 = vmatpush1.msra.mxu0 0.0
        %1269 = vmatprep.subr.mxu0 0.0
        %1270 = vmatpush1.msra.mxu0 0.0
        %1271 = vmatprep.subr.mxu0 0.0
        %1272 = vmatpush1.msra.mxu0 0.0
        %1273 = vmatprep.subr.mxu0 0.0
        %1274 = vmatpush1.msra.mxu0 0.0
        %1275 = vmatprep.subr.mxu0 0.0
        %1276 = vmatpush1.msra.mxu0 0.0
        %1277 = vmatprep.subr.mxu0 0.0
        %1278 = vmatpush1.msra.mxu0 0.0
        %1279 = vmatprep.subr.mxu0 0.0
        %1280 = vmatpush1.msra.mxu0 0.0
        %1281 = vmatprep.subr.mxu0 0.0
        %1282 = vmatpush1.msra.mxu0 0.0
        %1283 = vmatprep.subr.mxu0 0.0
        %1284 = vmatpush1.msra.mxu0 0.0
        %1285 = vmatprep.subr.mxu0 0.0
        %1286 = vmatpush1.msra.mxu0 0.0
        %1287 = vmatprep.subr.mxu0 0.0
        %1288 = vmatpush1.msra.mxu0 0.0
        %1289 = vmatprep.subr.mxu0 0.0
        %1290 = vmatpush1.msra.mxu0 0.0
        %1291 = vmatprep.subr.mxu0 0.0
        %1292 = vmatpush1.msra.mxu0 0.0
        %1293 = vmatprep.subr.mxu0 0.0
        %1294 = vmatpush1.msra.mxu0 0.0
        %1295 = vmatprep.subr.mxu0 0.0
        %1296 = vmatpush1.msra.mxu0 0.0
        %1297 = vmatprep.subr.mxu0 0.0
        %1298 = vmatpush1.msra.mxu0 0.0
        %1299 = vmatprep.subr.mxu0 0.0
        %1300 = vmatpush1.msra.mxu0 0.0
        %1301 = vmatprep.subr.mxu0 0.0
        %1302 = vmatpush1.msra.mxu0 0.0
        %1303 = vmatprep.mubr.f32.mxu0 0.0
        %1304 = vmatmul.mubr.f32.gmra.mrb[0].mxu0 %v1237
        %v1305 = vpop.f32.mrb[0].mxu0
        %v1306 = vadd.f32 0.0, %v1305
        %v1307 = vpop.f32.mrb[0].mxu0
        %1308 = vdwg.mxu0
        %s1309 = scalar_lea.vmem %s5, 16
        %v1310 = vld [vmem:[%s1309] sm:$0xff]
        %v1312 = vsel %vm651, %v1306, 0
        %1314 = vmatprep.subr.mxu0 0.0
        %1315 = vmatpush1.msra.mxu0 %v1310
        %1316 = vmatprep.subr.mxu0 0.0
        %1317 = vmatpush1.msra.mxu0 0.0
        %1318 = vmatprep.subr.mxu0 0.0
        %1319 = vmatpush1.msra.mxu0 0.0
        %1320 = vmatprep.subr.mxu0 0.0
        %1321 = vmatpush1.msra.mxu0 0.0
        %1322 = vmatprep.subr.mxu0 0.0
        %1323 = vmatpush1.msra.mxu0 0.0
        %1324 = vmatprep.subr.mxu0 0.0
        %1325 = vmatpush1.msra.mxu0 0.0
        %1326 = vmatprep.subr.mxu0 0.0
        %1327 = vmatpush1.msra.mxu0 0.0
        %1328 = vmatprep.subr.mxu0 0.0
        %1329 = vmatpush1.msra.mxu0 0.0
        %1330 = vmatprep.subr.mxu0 0.0
        %1331 = vmatpush1.msra.mxu0 0.0
        %1332 = vmatprep.subr.mxu0 0.0
        %1333 = vmatpush1.msra.mxu0 0.0
        %1334 = vmatprep.subr.mxu0 0.0
        %1335 = vmatpush1.msra.mxu0 0.0
        %1336 = vmatprep.subr.mxu0 0.0
        %1337 = vmatpush1.msra.mxu0 0.0
        %1338 = vmatprep.subr.mxu0 0.0
        %1339 = vmatpush1.msra.mxu0 0.0
        %1340 = vmatprep.subr.mxu0 0.0
        %1341 = vmatpush1.msra.mxu0 0.0
        %1342 = vmatprep.subr.mxu0 0.0
        %1343 = vmatpush1.msra.mxu0 0.0
        %1344 = vmatprep.subr.mxu0 0.0
        %1345 = vmatpush1.msra.mxu0 0.0
        %1346 = vmatprep.subr.mxu0 0.0
        %1347 = vmatpush1.msra.mxu0 0.0
        %1348 = vmatprep.subr.mxu0 0.0
        %1349 = vmatpush1.msra.mxu0 0.0
        %1350 = vmatprep.subr.mxu0 0.0
        %1351 = vmatpush1.msra.mxu0 0.0
        %1352 = vmatprep.subr.mxu0 0.0
        %1353 = vmatpush1.msra.mxu0 0.0
        %1354 = vmatprep.subr.mxu0 0.0
        %1355 = vmatpush1.msra.mxu0 0.0
        %1356 = vmatprep.subr.mxu0 0.0
        %1357 = vmatpush1.msra.mxu0 0.0
        %1358 = vmatprep.subr.mxu0 0.0
        %1359 = vmatpush1.msra.mxu0 0.0
        %1360 = vmatprep.subr.mxu0 0.0
        %1361 = vmatpush1.msra.mxu0 0.0
        %1362 = vmatprep.subr.mxu0 0.0
        %1363 = vmatpush1.msra.mxu0 0.0
        %1364 = vmatprep.subr.mxu0 0.0
        %1365 = vmatpush1.msra.mxu0 0.0
        %1366 = vmatprep.subr.mxu0 0.0
        %1367 = vmatpush1.msra.mxu0 0.0
        %1368 = vmatprep.subr.mxu0 0.0
        %1369 = vmatpush1.msra.mxu0 0.0
        %1370 = vmatprep.subr.mxu0 0.0
        %1371 = vmatpush1.msra.mxu0 0.0
        %1372 = vmatprep.subr.mxu0 0.0
        %1373 = vmatpush1.msra.mxu0 0.0
        %1374 = vmatprep.subr.mxu0 0.0
        %1375 = vmatpush1.msra.mxu0 0.0
        %1376 = vmatprep.subr.mxu0 0.0
        %1377 = vmatpush1.msra.mxu0 0.0
        %1378 = vmatprep.mubr.f32.mxu0 0.0
        %1379 = vmatmul.mubr.f32.gmra.mrb[0].mxu0 %v1312
        %v1380 = vpop.f32.mrb[0].mxu0
        %v1381 = vadd.f32 0.0, %v1380
        %v1382 = vpop.f32.mrb[0].mxu0
        %1383 = vdwg.mxu0
        %v1384 = vadd.f32 %v1137, %v1381
        %1385 = vrot.lane.b32.xlu0 %v642, 104
        %v1386 = vpop.permute.xlu0 %1385
        %1387 = vrot.lane.b32.xlu0 %v642, 72
        %v1388 = vpop.permute.xlu0 %1387
        %v1389 = vsel %vm651, %v1386, 0
        %v1391 = vsel %vm651, %v1388, 0
        %1393 = vmatprep.subr.mxu0 0.0
        %1394 = vmatpush1.xpose.msra.mxu0 %v1391
        %1395 = vmatprep.subr.mxu0 0.0
        %1396 = vmatpush1.xpose.msra.mxu0 0.0
        %1397 = vmatprep.subr.mxu0 0.0
        %1398 = vmatpush1.xpose.msra.mxu0 0.0
        %1399 = vmatprep.subr.mxu0 0.0
        %1400 = vmatpush1.xpose.msra.mxu0 0.0
        %1401 = vmatprep.subr.mxu0 0.0
        %1402 = vmatpush1.xpose.msra.mxu0 0.0
        %1403 = vmatprep.subr.mxu0 0.0
        %1404 = vmatpush1.xpose.msra.mxu0 0.0
        %1405 = vmatprep.subr.mxu0 0.0
        %1406 = vmatpush1.xpose.msra.mxu0 0.0
        %1407 = vmatprep.subr.mxu0 0.0
        %1408 = vmatpush1.xpose.msra.mxu0 0.0
        %1409 = vmatprep.subr.mxu0 0.0
        %1410 = vmatpush1.xpose.msra.mxu0 0.0
        %1411 = vmatprep.subr.mxu0 0.0
        %1412 = vmatpush1.xpose.msra.mxu0 0.0
        %1413 = vmatprep.subr.mxu0 0.0
        %1414 = vmatpush1.xpose.msra.mxu0 0.0
        %1415 = vmatprep.subr.mxu0 0.0
        %1416 = vmatpush1.xpose.msra.mxu0 0.0
        %1417 = vmatprep.subr.mxu0 0.0
        %1418 = vmatpush1.xpose.msra.mxu0 0.0
        %1419 = vmatprep.subr.mxu0 0.0
        %1420 = vmatpush1.xpose.msra.mxu0 0.0
        %1421 = vmatprep.subr.mxu0 0.0
        %1422 = vmatpush1.xpose.msra.mxu0 0.0
        %1423 = vmatprep.subr.mxu0 0.0
        %1424 = vmatpush1.xpose.msra.mxu0 0.0
        %1425 = vmatprep.subr.mxu0 0.0
        %1426 = vmatpush1.xpose.msra.mxu0 0.0
        %1427 = vmatprep.subr.mxu0 0.0
        %1428 = vmatpush1.xpose.msra.mxu0 0.0
        %1429 = vmatprep.subr.mxu0 0.0
        %1430 = vmatpush1.xpose.msra.mxu0 0.0
        %1431 = vmatprep.subr.mxu0 0.0
        %1432 = vmatpush1.xpose.msra.mxu0 0.0
        %1433 = vmatprep.subr.mxu0 0.0
        %1434 = vmatpush1.xpose.msra.mxu0 0.0
        %1435 = vmatprep.subr.mxu0 0.0
        %1436 = vmatpush1.xpose.msra.mxu0 0.0
        %1437 = vmatprep.subr.mxu0 0.0
        %1438 = vmatpush1.xpose.msra.mxu0 0.0
        %1439 = vmatprep.subr.mxu0 0.0
        %1440 = vmatpush1.xpose.msra.mxu0 0.0
        %1441 = vmatprep.subr.mxu0 0.0
        %1442 = vmatpush1.xpose.msra.mxu0 0.0
        %1443 = vmatprep.subr.mxu0 0.0
        %1444 = vmatpush1.xpose.msra.mxu0 0.0
        %1445 = vmatprep.subr.mxu0 0.0
        %1446 = vmatpush1.xpose.msra.mxu0 0.0
        %1447 = vmatprep.subr.mxu0 0.0
        %1448 = vmatpush1.xpose.msra.mxu0 0.0
        %1449 = vmatprep.subr.mxu0 0.0
        %1450 = vmatpush1.xpose.msra.mxu0 0.0
        %1451 = vmatprep.subr.mxu0 0.0
        %1452 = vmatpush1.xpose.msra.mxu0 0.0
        %1453 = vmatprep.subr.mxu0 0.0
        %1454 = vmatpush1.xpose.msra.mxu0 0.0
        %1455 = vmatprep.subr.mxu0 0.0
        %1456 = vmatpush1.xpose.msra.mxu0 0.0
        %1457 = vmatprep.mubr.f32.mxu0 0.0
        %1458 = vmatmul.mubr.f32.gmra.mrb[0].mxu0 %v1389
        %v1459 = vpop.f32.mrb[0].mxu0
        %v1460 = vadd.f32 0.0, %v1459
        %v1461 = vpop.f32.mrb[0].mxu0
        %1462 = vdwg.mxu0
        %v1463 = vmul.f32 %v1460, 0.35355338
        %v1464 = vadd.f32 %v1463, %v731
        %v1465 = vsel %vm651, %v1464, -inf
        %1466 = vmax.xlane.f32.xlu0 %v1465
        %v1467 = vpop.xlane.xlu0 %1466
        %v1468 = vsub.f32 %v1464, %v1467
        %v1469 = vmul.f32 %v1468, 1.442695
        %v1470 = vpow.pop %v1469
        %v1471 = vsel %vm651, %v1470, 0.0
        %1472 = vadd.xlane.f32.xlu0 %v1471
        %v1473 = vpop.xlane.xlu0 %1472
        %v1474 = vrcp.pop %v1473
        %v1475 = vmul.f32 %v1470, %v1474
        %s1476 = scalar_lea.vmem %s547, 24 [#allocation4]
        %1477 = vst.msk [vmem:[%s1476] sm:$0xff] %vm651, %v1475
        %1478 = vrot.lane.b32.xlu0 %v642, 40
        %v1479 = vpop.permute.xlu0 %1478
        %v1482 = vsel %vm651, %v1475, 0
        %1484 = vmatprep.subr.mxu0 0.0
        %1485 = vmatpush1.msra.mxu0 %v1479
        %1486 = vmatprep.subr.mxu0 0.0
        %1487 = vmatpush1.msra.mxu0 0.0
        %1488 = vmatprep.subr.mxu0 0.0
        %1489 = vmatpush1.msra.mxu0 0.0
        %1490 = vmatprep.subr.mxu0 0.0
        %1491 = vmatpush1.msra.mxu0 0.0
        %1492 = vmatprep.subr.mxu0 0.0
        %1493 = vmatpush1.msra.mxu0 0.0
        %1494 = vmatprep.subr.mxu0 0.0
        %1495 = vmatpush1.msra.mxu0 0.0
        %1496 = vmatprep.subr.mxu0 0.0
        %1497 = vmatpush1.msra.mxu0 0.0
        %1498 = vmatprep.subr.mxu0 0.0
        %1499 = vmatpush1.msra.mxu0 0.0
        %1500 = vmatprep.subr.mxu0 0.0
        %1501 = vmatpush1.msra.mxu0 0.0
        %1502 = vmatprep.subr.mxu0 0.0
        %1503 = vmatpush1.msra.mxu0 0.0
        %1504 = vmatprep.subr.mxu0 0.0
        %1505 = vmatpush1.msra.mxu0 0.0
        %1506 = vmatprep.subr.mxu0 0.0
        %1507 = vmatpush1.msra.mxu0 0.0
        %1508 = vmatprep.subr.mxu0 0.0
        %1509 = vmatpush1.msra.mxu0 0.0
        %1510 = vmatprep.subr.mxu0 0.0
        %1511 = vmatpush1.msra.mxu0 0.0
        %1512 = vmatprep.subr.mxu0 0.0
        %1513 = vmatpush1.msra.mxu0 0.0
        %1514 = vmatprep.subr.mxu0 0.0
        %1515 = vmatpush1.msra.mxu0 0.0
        %1516 = vmatprep.subr.mxu0 0.0
        %1517 = vmatpush1.msra.mxu0 0.0
        %1518 = vmatprep.subr.mxu0 0.0
        %1519 = vmatpush1.msra.mxu0 0.0
        %1520 = vmatprep.subr.mxu0 0.0
        %1521 = vmatpush1.msra.mxu0 0.0
        %1522 = vmatprep.subr.mxu0 0.0
        %1523 = vmatpush1.msra.mxu0 0.0
        %1524 = vmatprep.subr.mxu0 0.0
        %1525 = vmatpush1.msra.mxu0 0.0
        %1526 = vmatprep.subr.mxu0 0.0
        %1527 = vmatpush1.msra.mxu0 0.0
        %1528 = vmatprep.subr.mxu0 0.0
        %1529 = vmatpush1.msra.mxu0 0.0
        %1530 = vmatprep.subr.mxu0 0.0
        %1531 = vmatpush1.msra.mxu0 0.0
        %1532 = vmatprep.subr.mxu0 0.0
        %1533 = vmatpush1.msra.mxu0 0.0
        %1534 = vmatprep.subr.mxu0 0.0
        %1535 = vmatpush1.msra.mxu0 0.0
        %1536 = vmatprep.subr.mxu0 0.0
        %1537 = vmatpush1.msra.mxu0 0.0
        %1538 = vmatprep.subr.mxu0 0.0
        %1539 = vmatpush1.msra.mxu0 0.0
        %1540 = vmatprep.subr.mxu0 0.0
        %1541 = vmatpush1.msra.mxu0 0.0
        %1542 = vmatprep.subr.mxu0 0.0
        %1543 = vmatpush1.msra.mxu0 0.0
        %1544 = vmatprep.subr.mxu0 0.0
        %1545 = vmatpush1.msra.mxu0 0.0
        %1546 = vmatprep.subr.mxu0 0.0
        %1547 = vmatpush1.msra.mxu0 0.0
        %1548 = vmatprep.mubr.f32.mxu0 0.0
        %1549 = vmatmul.mubr.f32.gmra.mrb[0].mxu0 %v1482
        %v1550 = vpop.f32.mrb[0].mxu0
        %v1551 = vadd.f32 0.0, %v1550
        %v1552 = vpop.f32.mrb[0].mxu0
        %1553 = vdwg.mxu0
        %s1554 = scalar_lea.vmem %s5, 24
        %v1555 = vld [vmem:[%s1554] sm:$0xff]
        %v1557 = vsel %vm651, %v1551, 0
        %1559 = vmatprep.subr.mxu0 0.0
        %1560 = vmatpush1.msra.mxu0 %v1555
        %1561 = vmatprep.subr.mxu0 0.0
        %1562 = vmatpush1.msra.mxu0 0.0
        %1563 = vmatprep.subr.mxu0 0.0
        %1564 = vmatpush1.msra.mxu0 0.0
        %1565 = vmatprep.subr.mxu0 0.0
        %1566 = vmatpush1.msra.mxu0 0.0
        %1567 = vmatprep.subr.mxu0 0.0
        %1568 = vmatpush1.msra.mxu0 0.0
        %1569 = vmatprep.subr.mxu0 0.0
        %1570 = vmatpush1.msra.mxu0 0.0
        %1571 = vmatprep.subr.mxu0 0.0
        %1572 = vmatpush1.msra.mxu0 0.0
        %1573 = vmatprep.subr.mxu0 0.0
        %1574 = vmatpush1.msra.mxu0 0.0
        %1575 = vmatprep.subr.mxu0 0.0
        %1576 = vmatpush1.msra.mxu0 0.0
        %1577 = vmatprep.subr.mxu0 0.0
        %1578 = vmatpush1.msra.mxu0 0.0
        %1579 = vmatprep.subr.mxu0 0.0
        %1580 = vmatpush1.msra.mxu0 0.0
        %1581 = vmatprep.subr.mxu0 0.0
        %1582 = vmatpush1.msra.mxu0 0.0
        %1583 = vmatprep.subr.mxu0 0.0
        %1584 = vmatpush1.msra.mxu0 0.0
        %1585 = vmatprep.subr.mxu0 0.0
        %1586 = vmatpush1.msra.mxu0 0.0
        %1587 = vmatprep.subr.mxu0 0.0
        %1588 = vmatpush1.msra.mxu0 0.0
        %1589 = vmatprep.subr.mxu0 0.0
        %1590 = vmatpush1.msra.mxu0 0.0
        %1591 = vmatprep.subr.mxu0 0.0
        %1592 = vmatpush1.msra.mxu0 0.0
        %1593 = vmatprep.subr.mxu0 0.0
        %1594 = vmatpush1.msra.mxu0 0.0
        %1595 = vmatprep.subr.mxu0 0.0
        %1596 = vmatpush1.msra.mxu0 0.0
        %1597 = vmatprep.subr.mxu0 0.0
        %1598 = vmatpush1.msra.mxu0 0.0
        %1599 = vmatprep.subr.mxu0 0.0
        %1600 = vmatpush1.msra.mxu0 0.0
        %1601 = vmatprep.subr.mxu0 0.0
        %1602 = vmatpush1.msra.mxu0 0.0
        %1603 = vmatprep.subr.mxu0 0.0
        %1604 = vmatpush1.msra.mxu0 0.0
        %1605 = vmatprep.subr.mxu0 0.0
        %1606 = vmatpush1.msra.mxu0 0.0
        %1607 = vmatprep.subr.mxu0 0.0
        %1608 = vmatpush1.msra.mxu0 0.0
        %1609 = vmatprep.subr.mxu0 0.0
        %1610 = vmatpush1.msra.mxu0 0.0
        %1611 = vmatprep.subr.mxu0 0.0
        %1612 = vmatpush1.msra.mxu0 0.0
        %1613 = vmatprep.subr.mxu0 0.0
        %1614 = vmatpush1.msra.mxu0 0.0
        %1615 = vmatprep.subr.mxu0 0.0
        %1616 = vmatpush1.msra.mxu0 0.0
        %1617 = vmatprep.subr.mxu0 0.0
        %1618 = vmatpush1.msra.mxu0 0.0
        %1619 = vmatprep.subr.mxu0 0.0
        %1620 = vmatpush1.msra.mxu0 0.0
        %1621 = vmatprep.subr.mxu0 0.0
        %1622 = vmatpush1.msra.mxu0 0.0
        %1623 = vmatprep.mubr.f32.mxu0 0.0
        %1624 = vmatmul.mubr.f32.gmra.mrb[0].mxu0 %v1557
        %v1625 = vpop.f32.mrb[0].mxu0
        %v1626 = vadd.f32 0.0, %v1625
        %v1627 = vpop.f32.mrb[0].mxu0
        %1628 = vdwg.mxu0
        %v1629 = vadd.f32 %v1384, %v1626
        %v1630 = vld [vmem:[%s6] sm:$0x1]
        %v1632 = vlaneseq
        %v1633 = vshrl.u32 %v1632, 7
        %v1634 = vsub.s32 0, %v1633
        %v1635 = vrot.slane %v1630, %v1634
        %v1637 = vadd.f32 %v1629, %v1635
        %v1638 = vadd.f32 %v1637, %v559
        %v1639 = vsel %vm571, %v1638, 0.0
        %1640 = vadd.xlane.f32.xlu0 %v1639
        %v1641 = vpop.xlane.xlu0 %1640
        %v1642 = vrcp.pop 32.0
        %v1643 = vmul.f32 %v1641, %v1642
        %v1644 = vsub.f32 %v1638, %v1643
        %v1645 = vmul.f32 %v1644, %v1644
        %v1646 = vsel %vm571, %v1645, 0.0
        %1647 = vadd.xlane.f32.xlu0 %v1646
        %v1648 = vpop.xlane.xlu0 %1647
        %v1649 = vmul.f32 %v1648, %v1642
        %v1650 = vadd.f32 %v1649, 1e-05
        %v1651 = vrsqrt.pop %v1650
        %v1652 = vmul.f32 %v1644, %v1651
        %v1653 = vld [vmem:[%s7] sm:$0x1]
        %v1655 = vlaneseq
        %v1656 = vshrl.u32 %v1655, 7
        %v1657 = vsub.s32 0, %v1656
        %v1658 = vrot.slane %v1653, %v1657
        %v1660 = vmul.f32 %v1652, %v1658
        %v1661 = vld [vmem:[%s8] sm:$0x1]
        %v1663 = vlaneseq
        %v1664 = vshrl.u32 %v1663, 7
        %v1665 = vsub.s32 0, %v1664
        %v1666 = vrot.slane %v1661, %v1665
        %v1668 = vadd.f32 %v1660, %v1666
        %v1669 = vld [vmem:[%s555] sm:$0xff]
        %1671 = vset.pattern.permute.xlu0 0
        %1672 = vperm.xlu0 %1671, %v1669
        %v1673 = vpop.permute.xlu0 %1672
        %v1675 = vmul.f32 %v1668, %v1673
        %v1676 = vld [vmem:[%s9] sm:$0xff]
        %v1677 = vld [vmem:[%s9 + $0x8] sm:$0xff]
        %v1678 = vld [vmem:[%s9 + $0x10] sm:$0xff]
        %v1679 = vld [vmem:[%s9 + $0x18] sm:$0xff]
        %v1680 = vld [vmem:[%s10] sm:$0x1]
        %v1682 = vlaneseq
        %v1683 = vshrl.u32 %v1682, 7
        %v1684 = vsub.s32 0, %v1683
        %v1685 = vrot.slane %v1680, %v1684
        %v1688 = vsel %vm571, %v1675, 0
        %1690 = vmatprep.subr.mxu0 0.0
        %1691 = vmatpush1.msra.mxu0 %v1676
        %1692 = vmatprep.subr.mxu0 0.0
        %1693 = vmatpush1.msra.mxu0 %v1677
        %1694 = vmatprep.subr.mxu0 0.0
        %1695 = vmatpush1.msra.mxu0 %v1678
        %1696 = vmatprep.subr.mxu0 0.0
        %1697 = vmatpush1.msra.mxu0 %v1679
        %1698 = vmatprep.subr.mxu0 0.0
        %1699 = vmatpush1.msra.mxu0 0.0
        %1700 = vmatprep.subr.mxu0 0.0
        %1701 = vmatpush1.msra.mxu0 0.0
        %1702 = vmatprep.subr.mxu0 0.0
        %1703 = vmatpush1.msra.mxu0 0.0
        %1704 = vmatprep.subr.mxu0 0.0
        %1705 = vmatpush1.msra.mxu0 0.0
        %1706 = vmatprep.subr.mxu0 0.0
        %1707 = vmatpush1.msra.mxu0 0.0
        %1708 = vmatprep.subr.mxu0 0.0
        %1709 = vmatpush1.msra.mxu0 0.0
        %1710 = vmatprep.subr.mxu0 0.0
        %1711 = vmatpush1.msra.mxu0 0.0
        %1712 = vmatprep.subr.mxu0 0.0
        %1713 = vmatpush1.msra.mxu0 0.0
        %1714 = vmatprep.subr.mxu0 0.0
        %1715 = vmatpush1.msra.mxu0 0.0
        %1716 = vmatprep.subr.mxu0 0.0
        %1717 = vmatpush1.msra.mxu0 0.0
        %1718 = vmatprep.subr.mxu0 0.0
        %1719 = vmatpush1.msra.mxu0 0.0
        %1720 = vmatprep.subr.mxu0 0.0
        %1721 = vmatpush1.msra.mxu0 0.0
        %1722 = vmatprep.subr.mxu0 0.0
        %1723 = vmatpush1.msra.mxu0 0.0
        %1724 = vmatprep.subr.mxu0 0.0
        %1725 = vmatpush1.msra.mxu0 0.0
        %1726 = vmatprep.subr.mxu0 0.0
        %1727 = vmatpush1.msra.mxu0 0.0
        %1728 = vmatprep.subr.mxu0 0.0
        %1729 = vmatpush1.msra.mxu0 0.0
        %1730 = vmatprep.subr.mxu0 0.0
        %1731 = vmatpush1.msra.mxu0 0.0
        %1732 = vmatprep.subr.mxu0 0.0
        %1733 = vmatpush1.msra.mxu0 0.0
        %1734 = vmatprep.subr.mxu0 0.0
        %1735 = vmatpush1.msra.mxu0 0.0
        %1736 = vmatprep.subr.mxu0 0.0
        %1737 = vmatpush1.msra.mxu0 0.0
        %1738 = vmatprep.subr.mxu0 0.0
        %1739 = vmatpush1.msra.mxu0 0.0
        %1740 = vmatprep.subr.mxu0 0.0
        %1741 = vmatpush1.msra.mxu0 0.0
        %1742 = vmatprep.subr.mxu0 0.0
        %1743 = vmatpush1.msra.mxu0 0.0
        %1744 = vmatprep.subr.mxu0 0.0
        %1745 = vmatpush1.msra.mxu0 0.0
        %1746 = vmatprep.subr.mxu0 0.0
        %1747 = vmatpush1.msra.mxu0 0.0
        %1748 = vmatprep.subr.mxu0 0.0
        %1749 = vmatpush1.msra.mxu0 0.0
        %1750 = vmatprep.subr.mxu0 0.0
        %1751 = vmatpush1.msra.mxu0 0.0
        %1752 = vmatprep.subr.mxu0 0.0
        %1753 = vmatpush1.msra.mxu0 0.0
        %1754 = vmatprep.mubr.f32.mxu0 0.0
        %1755 = vmatmul.mubr.f32.gmra.mrb[0].mxu0 %v1688
        %v1756 = vpop.f32.mrb[0].mxu0
        %v1757 = vadd.f32 %v1685, %v1756
        %v1758 = vpop.f32.mrb[0].mxu0
        %1759 = vdwg.mxu0
        %v1760 = vmax.f32 %v1757, 0.0
        %v1761 = vld [vmem:[%s11] sm:$0xff]
        %v1762 = vld [vmem:[%s11 + $0x8] sm:$0xff]
        %v1763 = vld [vmem:[%s11 + $0x10] sm:$0xff]
        %v1764 = vld [vmem:[%s11 + $0x18] sm:$0xff]
        %v1765 = vld [vmem:[%s11 + $0x20] sm:$0xff]
        %v1766 = vld [vmem:[%s11 + $0x28] sm:$0xff]
        %v1767 = vld [vmem:[%s11 + $0x30] sm:$0xff]
        %v1768 = vld [vmem:[%s11 + $0x38] sm:$0xff]
        %v1769 = vld [vmem:[%s12] sm:$0x1]
        %v1771 = vlaneseq
        %v1772 = vshrl.u32 %v1771, 7
        %v1773 = vsub.s32 0, %v1772
        %v1774 = vrot.slane %v1769, %v1773
        %vm1776 = vcmask 523264
        %v1778 = vsel %vm1776, %v1760, 0
        %1780 = vmatprep.subr.mxu0 0.0
        %1781 = vmatpush1.msra.mxu0 %v1761
        %1782 = vmatprep.subr.mxu0 0.0
        %1783 = vmatpush1.msra.mxu0 %v1762
        %1784 = vmatprep.subr.mxu0 0.0
        %1785 = vmatpush1.msra.mxu0 %v1763
        %1786 = vmatprep.subr.mxu0 0.0
        %1787 = vmatpush1.msra.mxu0 %v1764
        %1788 = vmatprep.subr.mxu0 0.0
        %1789 = vmatpush1.msra.mxu0 %v1765
        %1790 = vmatprep.subr.mxu0 0.0
        %1791 = vmatpush1.msra.mxu0 %v1766
        %1792 = vmatprep.subr.mxu0 0.0
        %1793 = vmatpush1.msra.mxu0 %v1767
        %1794 = vmatprep.subr.mxu0 0.0
        %1795 = vmatpush1.msra.mxu0 %v1768
        %1796 = vmatprep.subr.mxu0 0.0
        %1797 = vmatpush1.msra.mxu0 0.0
        %1798 = vmatprep.subr.mxu0 0.0
        %1799 = vmatpush1.msra.mxu0 0.0
        %1800 = vmatprep.subr.mxu0 0.0
        %1801 = vmatpush1.msra.mxu0 0.0
        %1802 = vmatprep.subr.mxu0 0.0
        %1803 = vmatpush1.msra.mxu0 0.0
        %1804 = vmatprep.subr.mxu0 0.0
        %1805 = vmatpush1.msra.mxu0 0.0
        %1806 = vmatprep.subr.mxu0 0.0
        %1807 = vmatpush1.msra.mxu0 0.0
        %1808 = vmatprep.subr.mxu0 0.0
        %1809 = vmatpush1.msra.mxu0 0.0
        %1810 = vmatprep.subr.mxu0 0.0
        %1811 = vmatpush1.msra.mxu0 0.0
        %1812 = vmatprep.subr.mxu0 0.0
        %1813 = vmatpush1.msra.mxu0 0.0
        %1814 = vmatprep.subr.mxu0 0.0
        %1815 = vmatpush1.msra.mxu0 0.0
        %1816 = vmatprep.subr.mxu0 0.0
        %1817 = vmatpush1.msra.mxu0 0.0
        %1818 = vmatprep.subr.mxu0 0.0
        %1819 = vmatpush1.msra.mxu0 0.0
        %1820 = vmatprep.subr.mxu0 0.0
        %1821 = vmatpush1.msra.mxu0 0.0
        %1822 = vmatprep.subr.mxu0 0.0
        %1823 = vmatpush1.msra.mxu0 0.0
        %1824 = vmatprep.subr.mxu0 0.0
        %1825 = vmatpush1.msra.mxu0 0.0
        %1826 = vmatprep.subr.mxu0 0.0
        %1827 = vmatpush1.msra.mxu0 0.0
        %1828 = vmatprep.subr.mxu0 0.0
        %1829 = vmatpush1.msra.mxu0 0.0
        %1830 = vmatprep.subr.mxu0 0.0
        %1831 = vmatpush1.msra.mxu0 0.0
        %1832 = vmatprep.subr.mxu0 0.0
        %1833 = vmatpush1.msra.mxu0 0.0
        %1834 = vmatprep.subr.mxu0 0.0
        %1835 = vmatpush1.msra.mxu0 0.0
        %1836 = vmatprep.subr.mxu0 0.0
        %1837 = vmatpush1.msra.mxu0 0.0
        %1838 = vmatprep.subr.mxu0 0.0
        %1839 = vmatpush1.msra.mxu0 0.0
        %1840 = vmatprep.subr.mxu0 0.0
        %1841 = vmatpush1.msra.mxu0 0.0
        %1842 = vmatprep.subr.mxu0 0.0
        %1843 = vmatpush1.msra.mxu0 0.0
        %1844 = vmatprep.mubr.f32.mxu0 0.0
        %1845 = vmatmul.mubr.f32.gmra.mrb[0].mxu0 %v1778
        %v1846 = vpop.f32.mrb[0].mxu0
        %v1847 = vadd.f32 %v1774, %v1846
        %v1848 = vpop.f32.mrb[0].mxu0
        %1849 = vdwg.mxu0
        %v1850 = vadd.f32 %v1847, %v1675
        %v1851 = vsel %vm571, %v1850, 0.0
        %1852 = vadd.xlane.f32.xlu0 %v1851
        %v1853 = vpop.xlane.xlu0 %1852
        %v1854 = vmul.f32 %v1853, %v1642
        %v1855 = vsub.f32 %v1850, %v1854
        %v1856 = vmul.f32 %v1855, %v1855
        %v1857 = vsel %vm571, %v1856, 0.0
        %1858 = vadd.xlane.f32.xlu0 %v1857
        %v1859 = vpop.xlane.xlu0 %1858
        %v1860 = vmul.f32 %v1859, %v1642
        %v1861 = vadd.f32 %v1860, 1e-05
        %v1862 = vrsqrt.pop %v1861
        %v1863 = vmul.f32 %v1855, %v1862
        %v1864 = vld [vmem:[%s13] sm:$0x1]
        %v1866 = vlaneseq
        %v1867 = vshrl.u32 %v1866, 7
        %v1868 = vsub.s32 0, %v1867
        %v1869 = vrot.slane %v1864, %v1868
        %v1871 = vmul.f32 %v1863, %v1869
        %v1872 = vld [vmem:[%s14] sm:$0x1]
        %v1874 = vlaneseq
        %v1875 = vshrl.u32 %v1874, 7
        %v1876 = vsub.s32 0, %v1875
        %v1877 = vrot.slane %v1872, %v1876
        %v1879 = vadd.f32 %v1871, %v1877
        %v1880 = vmul.f32 %v1879, %v1673
        %1881 = vst.msk [vmem:[%s540] sm:$0xff] %vm571, %v1880
        %s1882 = sand.u32 %s372, 1
        %s1883 = scalar_lea.sflag [#allocation3], %s1882
        %s1884 = sand.u32 %s372, 1
        %s1885 = smul.addr %s1884, 8
        %s1886 = scalar_lea.vmem [#allocation2], %s1885
        %s1887 = sand.u32 %s398, 1
        %s1888 = scalar_lea.sflag [#allocation5], %s1887
        %s1889 = sand.u32 %s398, 1
        %s1890 = smul.addr %s1889, 32
        %s1891 = scalar_lea.vmem [#allocation4], %s1890
        // Predicated region
        $region81: #{tpu_custom_call.1} parent=79 // pred_check
          %p1892 = pneg %p382
        $region82: #{tpu_custom_call.1} parent=79 // pred_check_branch
          %1894 = sbr.rel (%p1892) target = $region84
        $region83: #{tpu_custom_call.1} parent=79 // pred_region
          %s1896 = ssub.s32 128, 128
          %1897 = vsyncadd %s1883, %s1896
          %s1898 = smul.addr %s34, 128
          %s1899 = scalar_lea.hbm %s15, %s1898
          %s1901 = sshll.u32 %s1886, 4
          %s1902 = int_to_ptr.vmem [resolvable:$true] %s1901
          %1904 = dma.vmem_to_hbm [thread:$0]  %s1902, 128, %s1899, %s1883
        $region84: #{tpu_custom_call.1} parent=79 // pred_fallthru
          _
        // Predicated region
        $region85: #{tpu_custom_call.1} parent=79 // pred_check
          %p1905 = pneg %p408
        $region86: #{tpu_custom_call.1} parent=79 // pred_check_branch
          %1907 = sbr.rel (%p1905) target = $region88
        $region87: #{tpu_custom_call.1} parent=79 // pred_region
          %s1909 = ssub.s32 512, 512
          %1910 = vsyncadd %s1888, %s1909
          %s1911 = smul.addr %s34, 128
          %s1912 = scalar_lea.hbm %s16, %s1911
          %s1913 = sshll.u32 %s1891, 4
          %s1914 = int_to_ptr.vmem [resolvable:$true] %s1913
          %1919 = dma.vmem_to_hbm [thread:$0]  %s1914, 512, %s1912, %s1888, 128, 256, 8
        $region88: #{tpu_custom_call.1} parent=79 // pred_fallthru
          _
      $region80: #{tpu_custom_call.1} parent=5 // pred_fallthru
        _
      %p1920 = scmp.le.s32.totalorder 2, %s29
      // Predicated region
      $region89: #{tpu_custom_call.1} parent=5 // pred_check
        %p1921 = pneg %p1920
      $region90: #{tpu_custom_call.1} parent=5 // pred_check_branch
        %1923 = sbr.rel (%p1921) target = $region92
      $region91: #{tpu_custom_call.1} parent=5 // pred_region
        %s1924 = ssub.s32 %s29, 2
        // Predicated region
        $region93: #{tpu_custom_call.1} parent=91 // pred_check
          %p1925 = pneg %p388
        $region94: #{tpu_custom_call.1} parent=91 // pred_check_branch
          %1927 = sbr.rel (%p1925) target = $region96
        $region95: #{tpu_custom_call.1} parent=91 // pred_region
          %s1928 = sand.u32 %s373, 1
          %s1929 = scalar_lea.sflag [#allocation3], %s1928
          %s1930 = sand.u32 %s373, 1
          %s1931 = smul.addr %s1930, 8
          %s1932 = scalar_lea.vmem [#allocation2], %s1931
          %1933 = dma.done %s1929, 128
        $region96: #{tpu_custom_call.1} parent=91 // pred_fallthru
          _
        // Predicated region
        $region97: #{tpu_custom_call.1} parent=91 // pred_check
          %p1934 = pneg %p414
        $region98: #{tpu_custom_call.1} parent=91 // pred_check_branch
          %1936 = sbr.rel (%p1934) target = $region100
        $region99: #{tpu_custom_call.1} parent=91 // pred_region
          %s1937 = sand.u32 %s399, 1
          %s1938 = scalar_lea.sflag [#allocation5], %s1937
          %s1939 = sand.u32 %s399, 1
          %s1940 = smul.addr %s1939, 32
          %s1941 = scalar_lea.vmem [#allocation4], %s1940
          %1942 = dma.done %s1938, 512
        $region100: #{tpu_custom_call.1} parent=91 // pred_fallthru
          _
      $region92: #{tpu_custom_call.1} parent=5 // pred_fallthru
        _
    $region6: #{tpu_custom_call.1} parent=1 // loop_footer
      %s33 = sadd.s32 1, %s29
    $region7: #{tpu_custom_call.1} parent=1 // loop_footer_branch
      %28 = sbr.rel target = $region3
    $region8: #{tpu_custom_call.1} parent=1 // loop_exit
      _
    %1943 = vsyncpa [#allocation3], 1
    %s1944 = scalar_lea.sflag [#allocation3], 1
    %1945 = vsyncpa %s1944, 1
    %1946 = vsyncpa [#allocation5], 1
    %s1947 = scalar_lea.sflag [#allocation5], 1
    %1948 = vsyncpa %s1947, 1

</llo_original>
